<compile_context>
chip_gen: v7x
topology: tpu7x:2x2x1
jax: 0.10.0
libtpu: 0.0.40
codegen_flags: <defaults>
</compile_context>

<pallas_src>
import jax
import jax.numpy as jnp
from jax.experimental import pallas as pl
from jax.experimental.pallas import tpu as pltpu


def _round_up(x, m):
    return ((x + m - 1) // m) * m


def tree_lstm_kernel(hl_ref, hr_ref, cl_ref, cr_ref, wl_ref, wr_ref, b_ref,
                     h_out_ref, c_out_ref):
    H = cl_ref.shape[-1]
    mm_dtype = wl_ref.dtype
    # Two (block_b, H) @ (H, 5H) MXU dots accumulated in f32 (no wrapper concat).
    gates = (jnp.dot(hl_ref[...].astype(mm_dtype), wl_ref[...],
                     preferred_element_type=jnp.float32)
             + jnp.dot(hr_ref[...].astype(mm_dtype), wr_ref[...],
                       preferred_element_type=jnp.float32)
             + b_ref[...])
    # Gate order along 5H: [g, i, f_l, f_r, o] (matches torch .chunk(5, dim=-1)).
    g = jnp.tanh(gates[:, 0:H])
    s = jax.nn.sigmoid(gates[:, H:5 * H])          # one EUP pass over the 4H slab
    i = s[:, 0 * H:1 * H]
    f_l = s[:, 1 * H:2 * H]
    f_r = s[:, 2 * H:3 * H]
    o = s[:, 3 * H:4 * H]
    c = (i * g
         + f_l * cl_ref[...].astype(jnp.float32)
         + f_r * cr_ref[...].astype(jnp.float32))
    h = o * jnp.tanh(c)
    h_out_ref[...] = h.astype(h_out_ref.dtype)
    c_out_ref[...] = c.astype(c_out_ref.dtype)


def prepare_params(weight, bias, matmul_dtype=jnp.bfloat16):
    """Hoisted per-layer prep. weight: (5H, 2H) torch layout; bias: (5H,).

    Returns (w_l, w_r, b2d) with w_l/w_r = (H, 5H) bf16 and b2d = (1, 5H) f32.
    Call this ONCE per tree/layer and reuse for every node.
    """
    H5, H2 = weight.shape
    H = H2 // 2
    w_l = weight[:, :H].T.astype(matmul_dtype)     # (H, 5H)
    w_r = weight[:, H:].T.astype(matmul_dtype)     # (H, 5H)
    b2d = bias.reshape(1, H5).astype(jnp.float32)  # (1, 5H)
    return w_l, w_r, b2d


def _default_vmem_limit():
    try:
        cap = pltpu.get_tpu_info().vmem_capacity_bytes
    except Exception:
        cap = 64 * 1024 * 1024                      # conservative (v7x per-TC)
    return min(int(cap * 0.6), 96 * 1024 * 1024)


def _pick_block_b(B, H, requested, vmem_limit_bytes):
    # Rough per-row VMEM bytes: 4 double-buffered (block_b, H) inputs (f32 worst
    # case), 2 double-buffered outputs, plus f32 gates / sigmoid / g,c,h slabs.
    io_per_row = 2 * (4 * H * 4) + 2 * (2 * H * 4)
    interm_per_row = (5 * H + 4 * H + 3 * H) * 4
    per_row = io_per_row + interm_per_row
    weight_bytes = 2 * (H * 5 * H) * 2 + 5 * H * 4   # resident bf16 W_l/W_r + bias
    budget = int(vmem_limit_bytes * 0.8) - weight_bytes
    cap = max(8, (budget // per_row) // 8 * 8)
    bb = max(8, min(requested, cap))
    if B > 8:
        # Keep >= 2 grid steps so v7x's two TensorCores both get work.
        bb = min(bb, _round_up(pl.cdiv(B, 2), 8))
    bb = min(bb, _round_up(B, 8))
    return max(8, bb)


def binary_tree_lstm_cell(h_l, c_l, h_r, c_r, params, *, block_b=1024,
                          vmem_limit_bytes=None):
    """params = prepare_params(weight, bias). Returns (h, c), each (B, H)."""
    w_l, w_r, b2d = params
    B, H = h_l.shape
    out_h_dtype, out_c_dtype = h_l.dtype, c_l.dtype

    if vmem_limit_bytes is None:
        vmem_limit_bytes = _default_vmem_limit()
    block_b = _pick_block_b(B, H, block_b, vmem_limit_bytes)
    grid = (pl.cdiv(B, block_b),)                   # ragged last block is masked

    h_spec = pl.BlockSpec((block_b, H), lambda i: (i, 0))
    c_spec = pl.BlockSpec((block_b, H), lambda i: (i, 0))
    # Grid-invariant operands: single-buffered (double-buffering only burns VMEM).
    w_spec = pl.BlockSpec((H, 5 * H), lambda i: (0, 0),
                          pipeline_mode=pl.Buffered(1))
    b_spec = pl.BlockSpec((1, 5 * H), lambda i: (0, 0),
                          pipeline_mode=pl.Buffered(1))
    out_spec = pl.BlockSpec((block_b, H), lambda i: (i, 0))

    h_out, c_out = pl.pallas_call(
        tree_lstm_kernel,
        out_shape=(jax.ShapeDtypeStruct((B, H), out_h_dtype),
                   jax.ShapeDtypeStruct((B, H), out_c_dtype)),
        grid_spec=pltpu.PrefetchScalarGridSpec(
            num_scalar_prefetch=0,
            grid=grid,
            in_specs=[h_spec, h_spec, c_spec, c_spec, w_spec, w_spec, b_spec],
            out_specs=[out_spec, out_spec],
        ),
        compiler_params=pltpu.CompilerParams(
            dimension_semantics=("parallel",),
            vmem_limit_bytes=vmem_limit_bytes),
    )(h_l, h_r, c_l, c_r, w_l, w_r, b2d)
    return h_out, c_out


def _orthogonal(key, rows, cols, dtype=jnp.float32):
    # Mimics nn.init.orthogonal_: QR of a gaussian, sign-corrected.
    flat = jax.random.normal(key, (max(rows, cols), min(rows, cols)), dtype=jnp.float32)
    q, r = jnp.linalg.qr(flat)
    q = q * jnp.sign(jnp.diag(r))[None, :]
    if rows < cols:
        q = q.T
    return q[:rows, :cols].astype(dtype)


def _reference(h_l, c_l, h_r, c_r, weight, bias, matmul_dtype=jnp.float32):
    """Pure-JAX reference; matmul_dtype lets us match the kernel's bf16 operands."""
    H = h_l.shape[-1]
    w_l = weight[:, :H].T.astype(matmul_dtype)
    w_r = weight[:, H:].T.astype(matmul_dtype)
    gates = (jnp.dot(h_l.astype(matmul_dtype), w_l, preferred_element_type=jnp.float32)
             + jnp.dot(h_r.astype(matmul_dtype), w_r, preferred_element_type=jnp.float32)
             + bias)
    g = jnp.tanh(gates[:, 0 * H:1 * H])
    i = jax.nn.sigmoid(gates[:, 1 * H:2 * H])
    f_l = jax.nn.sigmoid(gates[:, 2 * H:3 * H])
    f_r = jax.nn.sigmoid(gates[:, 3 * H:4 * H])
    o = jax.nn.sigmoid(gates[:, 4 * H:5 * H])
    c = i * g + f_l * c_l + f_r * c_r
    h = o * jnp.tanh(c)
    return h, c


if __name__ == "__main__":
    B, H = 24, 128          # small shapes; exercises 2 grid steps + ragged last block
    key = jax.random.PRNGKey(0)
    k_w, k_hl, k_cl, k_hr, k_cr = jax.random.split(key, 5)

    # Parameters (deterministic, matching reset_parameters semantics).
    weight = _orthogonal(k_w, 5 * H, 2 * H)               # (5H, 2H)
    bias = jnp.zeros((5 * H,), jnp.float32)
    bias = bias.at[2 * H:4 * H].set(1.0)                   # forget-gate bias = 1

    h_l = jax.random.normal(k_hl, (B, H), jnp.float32)
    c_l = jax.random.normal(k_cl, (B, H), jnp.float32)
    h_r = jax.random.normal(k_hr, (B, H), jnp.float32)
    c_r = jax.random.normal(k_cr, (B, H), jnp.float32)

    # Hoisted once-per-layer parameter prep (transpose/split/cast).
    params = prepare_params(weight, bias)

    h_out, c_out = binary_tree_lstm_cell(h_l, c_l, h_r, c_r, params)
    jax.block_until_ready((h_out, c_out))

    # Tight check against a reference using the same bf16 matmul operands.
    h_ref, c_ref = _reference(h_l, c_l, h_r, c_r, weight, bias,
                              matmul_dtype=jnp.bfloat16)
    assert jnp.allclose(h_out, h_ref, atol=1e-3, rtol=1e-3)
    assert jnp.allclose(c_out, c_ref, atol=1e-3, rtol=1e-3)

    # Loose sanity check against the full-f32 reference (torch semantics).
    h_f32, c_f32 = _reference(h_l, c_l, h_r, c_r, weight, bias)
    assert jnp.allclose(h_out, h_f32, atol=5e-2, rtol=5e-2)
    assert jnp.allclose(c_out, c_f32, atol=5e-2, rtol=5e-2)

    print("KERNEL_OK")
</pallas_src>

<mosaic_0001>
module attributes {stable_mosaic.version = 11 : i64} {
  func.func @tree_lstm_kernel(%arg0: i32, %arg1: memref<16x128xf32, #tpu.memory_space<vmem>>, %arg2: memref<16x128xf32, #tpu.memory_space<vmem>>, %arg3: memref<16x128xf32, #tpu.memory_space<vmem>>, %arg4: memref<16x128xf32, #tpu.memory_space<vmem>>, %arg5: memref<128x640xbf16, #tpu.memory_space<vmem>>, %arg6: memref<128x640xbf16, #tpu.memory_space<vmem>>, %arg7: memref<1x640xf32, #tpu.memory_space<vmem>>, %arg8: memref<16x128xf32, #tpu.memory_space<vmem>>, %arg9: memref<16x128xf32, #tpu.memory_space<vmem>>) attributes {dimension_semantics = [#tpu.dimension_semantics<parallel>], iteration_bounds = array<i64: 2>, scalar_prefetch = 0 : i64, scratch_operands = 0 : i64, tpu.core_type = #tpu.core_type<tc>, window_params = [{transform_indices = @transform_0, window_bounds = array<i64: 16, 128>}, {transform_indices = @transform_1, window_bounds = array<i64: 16, 128>}, {transform_indices = @transform_2, window_bounds = array<i64: 16, 128>}, {transform_indices = @transform_3, window_bounds = array<i64: 16, 128>}, {pipeline_mode = #tpu.pipeline_mode<synchronous>, transform_indices = @transform_4, window_bounds = array<i64: 128, 640>}, {pipeline_mode = #tpu.pipeline_mode<synchronous>, transform_indices = @transform_5, window_bounds = array<i64: 128, 640>}, {pipeline_mode = #tpu.pipeline_mode<synchronous>, transform_indices = @transform_6, window_bounds = array<i64: 1, 640>}, {transform_indices = @transform_7, window_bounds = array<i64: 16, 128>}, {transform_indices = @transform_8, window_bounds = array<i64: 16, 128>}]} {
    %c0 = arith.constant 0 : index
    %c0_0 = arith.constant 0 : index
    %0 = vector.load %arg1[%c0, %c0_0] : memref<16x128xf32, #tpu.memory_space<vmem>>, vector<16x128xf32>
    %1 = arith.truncf %0 : vector<16x128xf32> to vector<16x128xbf16>
    %c0_1 = arith.constant 0 : index
    %c0_2 = arith.constant 0 : index
    %2 = vector.load %arg5[%c0_1, %c0_2] : memref<128x640xbf16, #tpu.memory_space<vmem>>, vector<128x640xbf16>
    %cst = arith.constant dense<0.000000e+00> : vector<16x640xf32>
    %3 = tpu.matmul %1, %2, %cst {dimension_numbers = #tpu.dot_dimension_numbers<[1], [0], [0], [1], [0, 0, 1, 1], [], []>} : vector<16x128xbf16>, vector<128x640xbf16>, vector<16x640xf32> -> vector<16x640xf32>
    %c0_3 = arith.constant 0 : index
    %c0_4 = arith.constant 0 : index
    %4 = vector.load %arg2[%c0_3, %c0_4] : memref<16x128xf32, #tpu.memory_space<vmem>>, vector<16x128xf32>
    %5 = arith.truncf %4 : vector<16x128xf32> to vector<16x128xbf16>
    %c0_5 = arith.constant 0 : index
    %c0_6 = arith.constant 0 : index
    %6 = vector.load %arg6[%c0_5, %c0_6] : memref<128x640xbf16, #tpu.memory_space<vmem>>, vector<128x640xbf16>
    %cst_7 = arith.constant dense<0.000000e+00> : vector<16x640xf32>
    %7 = tpu.matmul %5, %6, %cst_7 {dimension_numbers = #tpu.dot_dimension_numbers<[1], [0], [0], [1], [0, 0, 1, 1], [], []>} : vector<16x128xbf16>, vector<128x640xbf16>, vector<16x640xf32> -> vector<16x640xf32>
    %8 = arith.addf %3, %7 : vector<16x640xf32>
    %c0_8 = arith.constant 0 : index
    %c0_9 = arith.constant 0 : index
    %9 = vector.load %arg7[%c0_8, %c0_9] : memref<1x640xf32, #tpu.memory_space<vmem>>, vector<1x640xf32>
    %10 = vector.broadcast %9 : vector<1x640xf32> to vector<16x640xf32>
    %11 = arith.addf %8, %10 : vector<16x640xf32>
    %12 = vector.extract_strided_slice %11 {offsets = [0, 0], sizes = [16, 128], strides = [1, 1]} : vector<16x640xf32> to vector<16x128xf32>
    %13 = math.tanh %12 : vector<16x128xf32>
    %14 = vector.extract_strided_slice %11 {offsets = [0, 128], sizes = [16, 512], strides = [1, 1]} : vector<16x640xf32> to vector<16x512xf32>
    %15 = arith.negf %14 : vector<16x512xf32>
    %16 = math.exp %15 : vector<16x512xf32>
    %cst_10 = arith.constant 1.000000e+00 : f32
    %17 = vector.broadcast %cst_10 : f32 to vector<16x512xf32>
    %18 = arith.addf %17, %16 : vector<16x512xf32>
    %19 = arith.divf %17, %18 : vector<16x512xf32>
    %20 = vector.extract_strided_slice %19 {offsets = [0, 0], sizes = [16, 128], strides = [1, 1]} : vector<16x512xf32> to vector<16x128xf32>
    %21 = vector.extract_strided_slice %19 {offsets = [0, 128], sizes = [16, 128], strides = [1, 1]} : vector<16x512xf32> to vector<16x128xf32>
    %22 = vector.extract_strided_slice %19 {offsets = [0, 256], sizes = [16, 128], strides = [1, 1]} : vector<16x512xf32> to vector<16x128xf32>
    %23 = vector.extract_strided_slice %19 {offsets = [0, 384], sizes = [16, 128], strides = [1, 1]} : vector<16x512xf32> to vector<16x128xf32>
    %24 = arith.mulf %20, %13 : vector<16x128xf32>
    %c0_11 = arith.constant 0 : index
    %c0_12 = arith.constant 0 : index
    %25 = vector.load %arg3[%c0_11, %c0_12] : memref<16x128xf32, #tpu.memory_space<vmem>>, vector<16x128xf32>
    %26 = arith.mulf %21, %25 : vector<16x128xf32>
    %27 = arith.addf %24, %26 : vector<16x128xf32>
    %c0_13 = arith.constant 0 : index
    %c0_14 = arith.constant 0 : index
    %28 = vector.load %arg4[%c0_13, %c0_14] : memref<16x128xf32, #tpu.memory_space<vmem>>, vector<16x128xf32>
    %29 = arith.mulf %22, %28 : vector<16x128xf32>
    %30 = arith.addf %27, %29 : vector<16x128xf32>
    %31 = math.tanh %30 : vector<16x128xf32>
    %32 = arith.mulf %23, %31 : vector<16x128xf32>
    %c0_15 = arith.constant 0 : index
    %c0_16 = arith.constant 0 : index
    %33 = vector.load %arg8[%c0_15, %c0_16] : memref<16x128xf32, #tpu.memory_space<vmem>>, vector<16x128xf32>
    tpu.vector_store %arg8[%c0_15, %c0_16], %32 {strides = array<i32>} : memref<16x128xf32, #tpu.memory_space<vmem>>, vector<16x128xf32>,
    %c0_17 = arith.constant 0 : index
    %c0_18 = arith.constant 0 : index
    %34 = vector.load %arg9[%c0_17, %c0_18] : memref<16x128xf32, #tpu.memory_space<vmem>>, vector<16x128xf32>
    tpu.vector_store %arg9[%c0_17, %c0_18], %30 {strides = array<i32>} : memref<16x128xf32, #tpu.memory_space<vmem>>, vector<16x128xf32>,
    return
  }
  func.func @transform_0(%arg0: i32) -> (i32, i32) {
    %c0_i32 = arith.constant 0 : i32
    %c0_i32_0 = arith.constant 0 : i32
    return %arg0, %c0_i32 : i32, i32
  }
  func.func @transform_1(%arg0: i32) -> (i32, i32) {
    %c0_i32 = arith.constant 0 : i32
    %c0_i32_0 = arith.constant 0 : i32
    return %arg0, %c0_i32 : i32, i32
  }
  func.func @transform_2(%arg0: i32) -> (i32, i32) {
    %c0_i32 = arith.constant 0 : i32
    %c0_i32_0 = arith.constant 0 : i32
    return %arg0, %c0_i32 : i32, i32
  }
  func.func @transform_3(%arg0: i32) -> (i32, i32) {
    %c0_i32 = arith.constant 0 : i32
    %c0_i32_0 = arith.constant 0 : i32
    return %arg0, %c0_i32 : i32, i32
  }
  func.func @transform_4(%arg0: i32) -> (i32, i32) {
    %c0_i32 = arith.constant 0 : i32
    %c0_i32_0 = arith.constant 0 : i32
    %c0_i32_1 = arith.constant 0 : i32
    return %c0_i32, %c0_i32_0 : i32, i32
  }
  func.func @transform_5(%arg0: i32) -> (i32, i32) {
    %c0_i32 = arith.constant 0 : i32
    %c0_i32_0 = arith.constant 0 : i32
    %c0_i32_1 = arith.constant 0 : i32
    return %c0_i32, %c0_i32_0 : i32, i32
  }
  func.func @transform_6(%arg0: i32) -> (i32, i32) {
    %c0_i32 = arith.constant 0 : i32
    %c0_i32_0 = arith.constant 0 : i32
    %c0_i32_1 = arith.constant 0 : i32
    return %c0_i32, %c0_i32_0 : i32, i32
  }
  func.func @transform_7(%arg0: i32) -> (i32, i32) {
    %c0_i32 = arith.constant 0 : i32
    %c0_i32_0 = arith.constant 0 : i32
    return %arg0, %c0_i32 : i32, i32
  }
  func.func @transform_8(%arg0: i32) -> (i32, i32) {
    %c0_i32 = arith.constant 0 : i32
    %c0_i32_0 = arith.constant 0 : i32
    return %arg0, %c0_i32 : i32, i32
  }
}

</mosaic_0001>

<llo_original>
// kernel: tpu_custom_call.1
$region0: #{tpu_custom_call.1}
  #allocation0 [shape = 'u32[]', space=smem, size = 0x4, offset = 0x4, fixed_abs, tag = 'smem constant byte address 0x4 - core index']
  #allocation1 [shape = 'u32[144,128]{1,0:T(1,128)}', space=vmem, size = 0x12000, scoped, tag = 'internal scratch']
  %s0 = inlined_call_operand.hbm [shape: f32[24,128], index: 0, kind: input, shape index: {}]
  %s1 = inlined_call_operand.hbm [shape: f32[24,128], index: 1, kind: input, shape index: {}]
  %s2 = inlined_call_operand.hbm [shape: f32[24,128], index: 2, kind: input, shape index: {}]
  %s3 = inlined_call_operand.hbm [shape: f32[24,128], index: 3, kind: input, shape index: {}]
  %s4 = inlined_call_operand.hbm [shape: bf16[128,640], index: 4, kind: input, shape index: {}]
  %s5 = inlined_call_operand.hbm [shape: bf16[128,640], index: 5, kind: input, shape index: {}]
  %s6 = inlined_call_operand.vmem [shape: f32[1,640], index: 6, kind: input, shape index: {}]
  %s7 = inlined_call_operand.hbm [shape: f32[24,128], index: 7, kind: output, shape index: {0}]
  %s8 = inlined_call_operand.hbm [shape: f32[24,128], index: 8, kind: output, shape index: {1}]
  %9 = xla_tuple %s7, %s8
  %s10 = sld [smem:[#allocation0]]
  $region93: #{tpu_custom_call.1} parent=0
    _
  %s12 = ssub.s32 1, %s10
  %s13 = scalar_select 0, %s12, %s10
  $region1: #{tpu_custom_call.1} parent=0
    #allocation2 [shape = 'u8[16384]{0}', space=vmem, size = 0x4000, scoped, tag = 'input window, operand 0']
    #allocation3 [shape = 's32[2]{0}', space=sflag, size = 0x8, scoped, tag = 'scoped memory for tpu_custom_call.1']
    #allocation4 [shape = 's32[2]{0}', space=sflag, size = 0x8, scoped, tag = 'scoped memory for tpu_custom_call.1']
    #allocation5 [shape = 'u8[16384]{0}', space=vmem, size = 0x4000, scoped, tag = 'input window, operand 1']
    #allocation6 [shape = 's32[2]{0}', space=sflag, size = 0x8, scoped, tag = 'scoped memory for tpu_custom_call.1']
    #allocation7 [shape = 'u8[16384]{0}', space=vmem, size = 0x4000, scoped, tag = 'input window, operand 2']
    #allocation8 [shape = 'u8[16384]{0}', space=vmem, size = 0x4000, scoped, tag = 'input window, operand 3']
    #allocation9 [shape = 's32[2]{0}', space=sflag, size = 0x8, scoped, tag = 'scoped memory for tpu_custom_call.1']
    #allocation10 [shape = 'u8[163840]{0}', space=vmem, size = 0x28000, scoped, tag = 'input window, operand 4, single buffered']
    #allocation11 [shape = 'u8[163840]{0}', space=vmem, size = 0x28000, scoped, tag = 'input window, operand 5, single buffered']
    #allocation12 [shape = 's32[1]{0}', space=sflag, size = 0x4, scoped, tag = 'scoped memory for tpu_custom_call.1']
    #allocation13 [shape = 'u8[16384]{0}', space=vmem, size = 0x4000, scoped, tag = 'output window, operand 0']
    #allocation14 [shape = 'u8[16384]{0}', space=vmem, size = 0x4000, scoped, tag = 'output window, operand 1']
    #allocation15 [shape = 's32[2]{0}', space=sflag, size = 0x8, scoped, tag = 'scoped memory for tpu_custom_call.1']
    %14 = vsyncpa [#allocation3], 0
    %s15 = scalar_lea.sflag [#allocation3], 1
    %16 = vsyncpa %s15, 0
    %17 = vsyncpa [#allocation6], 0
    %s18 = scalar_lea.sflag [#allocation6], 1
    %19 = vsyncpa %s18, 0
    %20 = vsyncpa [#allocation9], 0
    %s21 = scalar_lea.sflag [#allocation9], 1
    %22 = vsyncpa %s21, 0
    %23 = vsyncpa [#allocation12], 0
    %24 = vsyncpa [#allocation4], 0
    %s25 = scalar_lea.sflag [#allocation4], 1
    %26 = vsyncpa %s25, 0
    %27 = vsyncpa [#allocation15], 0
    %s28 = scalar_lea.sflag [#allocation15], 1
    %29 = vsyncpa %s28, 0
    loop: start=0, step=1, limit=4
    $region2: #{tpu_custom_call.1} parent=1 // loop_pre_header
      _
    $region3: #{tpu_custom_call.1} parent=1 // loop_header
      %s31 = sphi 0, %s35
      %p32 = scmp.ge.s32.totalorder %s31, 4
      %s41 = sphi 0, %s43
      %s44 = sphi 0, %s41
      %s45 = sphi 0, %s44
      %s61 = sphi 0, %s45
      %s67 = sphi 0, %s69
      %s70 = sphi 0, %s67
      %s71 = sphi 0, %s70
      %s87 = sphi 0, %s71
      %s93 = sphi 0, %s95
      %s96 = sphi 0, %s93
      %s97 = sphi 0, %s96
      %s113 = sphi 0, %s97
      %s119 = sphi 0, %s121
      %s122 = sphi 0, %s119
      %s123 = sphi 0, %s122
      %s139 = sphi 0, %s123
      %s143 = sphi 0, %s143
      %s145 = sphi 0, %s143
      %s146 = sphi 0, %s145
      %s160 = sphi 0, %s146
      %s164 = sphi 0, %s164
      %s166 = sphi 0, %s164
      %s167 = sphi 0, %s166
      %s181 = sphi 0, %s167
      %s185 = sphi 0, %s185
      %s187 = sphi 0, %s185
      %s188 = sphi 0, %s187
      %s202 = sphi 0, %s188
      %s208 = sphi 0, %s210
      %s211 = sphi 0, %s208
      %s212 = sphi 0, %s211
      %s228 = sphi 0, %s212
      %s234 = sphi 0, %s236
      %s237 = sphi 0, %s234
      %s238 = sphi 0, %s237
      %s254 = sphi 0, %s238
    $region4: #{tpu_custom_call.1} parent=1 // loop_header_branch
      %34 = sbr.rel (%p32) target = $region8
    $region5: #{tpu_custom_call.1} parent=1 // loop_body
      %s36 = ssub.s32 %s31, 1
      %s37 = ssub.s32 %s31, 2
      %s38 = sadd.s32 %s31, 1
      %s39 = ssub.s32 %s31, %s38
      %p40 = scmp.eq.s32.totalorder %s39, 0
      %s42 = sadd.s32 %s41, 1
      %s43 = scalar_select %p40, %s41, %s42
      %p46 = pneg %p40
      %p47 = scmp.eq.s32.totalorder %s31, 1
      %p48 = por %p46, %p47
      %p49 = scmp.ne.s32.totalorder %s41, %s44
      %p50 = scmp.eq.s32.totalorder %s31, 0
      %p51 = por %p49, %p50
      %p52 = scmp.ne.s32.totalorder %s41, %s44
      %p53 = scmp.eq.s32.totalorder %s36, 1
      %p54 = por %p52, %p53
      %p55 = scmp.ne.s32.totalorder %s44, %s45
      %p56 = scmp.eq.s32.totalorder %s36, 0
      %p57 = por %p55, %p56
      %p58 = scmp.ne.s32.totalorder %s44, %s45
      %p59 = scmp.eq.s32.totalorder %s37, 1
      %p60 = por %p58, %p59
      %p62 = scmp.ne.s32.totalorder %s45, %s61
      %p63 = scmp.eq.s32.totalorder %s37, 0
      %p64 = por %p62, %p63
      %s65 = ssub.s32 %s31, %s38
      %p66 = scmp.eq.s32.totalorder %s65, 0
      %s68 = sadd.s32 %s67, 1
      %s69 = scalar_select %p66, %s67, %s68
      %p72 = pneg %p66
      %p73 = scmp.eq.s32.totalorder %s31, 1
      %p74 = por %p72, %p73
      %p75 = scmp.ne.s32.totalorder %s67, %s70
      %p76 = scmp.eq.s32.totalorder %s31, 0
      %p77 = por %p75, %p76
      %p78 = scmp.ne.s32.totalorder %s67, %s70
      %p79 = scmp.eq.s32.totalorder %s36, 1
      %p80 = por %p78, %p79
      %p81 = scmp.ne.s32.totalorder %s70, %s71
      %p82 = scmp.eq.s32.totalorder %s36, 0
      %p83 = por %p81, %p82
      %p84 = scmp.ne.s32.totalorder %s70, %s71
      %p85 = scmp.eq.s32.totalorder %s37, 1
      %p86 = por %p84, %p85
      %p88 = scmp.ne.s32.totalorder %s71, %s87
      %p89 = scmp.eq.s32.totalorder %s37, 0
      %p90 = por %p88, %p89
      %s91 = ssub.s32 %s31, %s38
      %p92 = scmp.eq.s32.totalorder %s91, 0
      %s94 = sadd.s32 %s93, 1
      %s95 = scalar_select %p92, %s93, %s94
      %p98 = pneg %p92
      %p99 = scmp.eq.s32.totalorder %s31, 1
      %p100 = por %p98, %p99
      %p101 = scmp.ne.s32.totalorder %s93, %s96
      %p102 = scmp.eq.s32.totalorder %s31, 0
      %p103 = por %p101, %p102
      %p104 = scmp.ne.s32.totalorder %s93, %s96
      %p105 = scmp.eq.s32.totalorder %s36, 1
      %p106 = por %p104, %p105
      %p107 = scmp.ne.s32.totalorder %s96, %s97
      %p108 = scmp.eq.s32.totalorder %s36, 0
      %p109 = por %p107, %p108
      %p110 = scmp.ne.s32.totalorder %s96, %s97
      %p111 = scmp.eq.s32.totalorder %s37, 1
      %p112 = por %p110, %p111
      %p114 = scmp.ne.s32.totalorder %s97, %s113
      %p115 = scmp.eq.s32.totalorder %s37, 0
      %p116 = por %p114, %p115
      %s117 = ssub.s32 %s31, %s38
      %p118 = scmp.eq.s32.totalorder %s117, 0
      %s120 = sadd.s32 %s119, 1
      %s121 = scalar_select %p118, %s119, %s120
      %p124 = pneg %p118
      %p125 = scmp.eq.s32.totalorder %s31, 1
      %p126 = por %p124, %p125
      %p127 = scmp.ne.s32.totalorder %s119, %s122
      %p128 = scmp.eq.s32.totalorder %s31, 0
      %p129 = por %p127, %p128
      %p130 = scmp.ne.s32.totalorder %s119, %s122
      %p131 = scmp.eq.s32.totalorder %s36, 1
      %p132 = por %p130, %p131
      %p133 = scmp.ne.s32.totalorder %s122, %s123
      %p134 = scmp.eq.s32.totalorder %s36, 0
      %p135 = por %p133, %p134
      %p136 = scmp.ne.s32.totalorder %s122, %s123
      %p137 = scmp.eq.s32.totalorder %s37, 1
      %p138 = por %p136, %p137
      %p140 = scmp.ne.s32.totalorder %s123, %s139
      %p141 = scmp.eq.s32.totalorder %s37, 0
      %p142 = por %p140, %p141
      %s144 = sadd.s32 %s143, 1
      %p147 = scmp.eq.s32.totalorder %s31, 1
      %p148 = scmp.ne.s32.totalorder %s143, %s145
      %p149 = scmp.eq.s32.totalorder %s31, 0
      %p150 = por %p148, %p149
      %p151 = scmp.ne.s32.totalorder %s143, %s145
      %p152 = scmp.eq.s32.totalorder %s36, 1
      %p153 = por %p151, %p152
      %p154 = scmp.ne.s32.totalorder %s145, %s146
      %p155 = scmp.eq.s32.totalorder %s36, 0
      %p156 = por %p154, %p155
      %p157 = scmp.ne.s32.totalorder %s145, %s146
      %p158 = scmp.eq.s32.totalorder %s37, 1
      %p159 = por %p157, %p158
      %p161 = scmp.ne.s32.totalorder %s146, %s160
      %p162 = scmp.eq.s32.totalorder %s37, 0
      %p163 = por %p161, %p162
      %s165 = sadd.s32 %s164, 1
      %p168 = scmp.eq.s32.totalorder %s31, 1
      %p169 = scmp.ne.s32.totalorder %s164, %s166
      %p170 = scmp.eq.s32.totalorder %s31, 0
      %p171 = por %p169, %p170
      %p172 = scmp.ne.s32.totalorder %s164, %s166
      %p173 = scmp.eq.s32.totalorder %s36, 1
      %p174 = por %p172, %p173
      %p175 = scmp.ne.s32.totalorder %s166, %s167
      %p176 = scmp.eq.s32.totalorder %s36, 0
      %p177 = por %p175, %p176
      %p178 = scmp.ne.s32.totalorder %s166, %s167
      %p179 = scmp.eq.s32.totalorder %s37, 1
      %p180 = por %p178, %p179
      %p182 = scmp.ne.s32.totalorder %s167, %s181
      %p183 = scmp.eq.s32.totalorder %s37, 0
      %p184 = por %p182, %p183
      %s186 = sadd.s32 %s185, 1
      %p189 = scmp.eq.s32.totalorder %s31, 1
      %p190 = scmp.ne.s32.totalorder %s185, %s187
      %p191 = scmp.eq.s32.totalorder %s31, 0
      %p192 = por %p190, %p191
      %p193 = scmp.ne.s32.totalorder %s185, %s187
      %p194 = scmp.eq.s32.totalorder %s36, 1
      %p195 = por %p193, %p194
      %p196 = scmp.ne.s32.totalorder %s187, %s188
      %p197 = scmp.eq.s32.totalorder %s36, 0
      %p198 = por %p196, %p197
      %p199 = scmp.ne.s32.totalorder %s187, %s188
      %p200 = scmp.eq.s32.totalorder %s37, 1
      %p201 = por %p199, %p200
      %p203 = scmp.ne.s32.totalorder %s188, %s202
      %p204 = scmp.eq.s32.totalorder %s37, 0
      %p205 = por %p203, %p204
      %s206 = ssub.s32 %s31, %s38
      %p207 = scmp.eq.s32.totalorder %s206, 0
      %s209 = sadd.s32 %s208, 1
      %s210 = scalar_select %p207, %s208, %s209
      %p213 = pneg %p207
      %p214 = scmp.eq.s32.totalorder %s31, 1
      %p215 = por %p213, %p214
      %p216 = scmp.ne.s32.totalorder %s208, %s211
      %p217 = scmp.eq.s32.totalorder %s31, 0
      %p218 = por %p216, %p217
      %p219 = scmp.ne.s32.totalorder %s208, %s211
      %p220 = scmp.eq.s32.totalorder %s36, 1
      %p221 = por %p219, %p220
      %p222 = scmp.ne.s32.totalorder %s211, %s212
      %p223 = scmp.eq.s32.totalorder %s36, 0
      %p224 = por %p222, %p223
      %p225 = scmp.ne.s32.totalorder %s211, %s212
      %p226 = scmp.eq.s32.totalorder %s37, 1
      %p227 = por %p225, %p226
      %p229 = scmp.ne.s32.totalorder %s212, %s228
      %p230 = scmp.eq.s32.totalorder %s37, 0
      %p231 = por %p229, %p230
      %s232 = ssub.s32 %s31, %s38
      %p233 = scmp.eq.s32.totalorder %s232, 0
      %s235 = sadd.s32 %s234, 1
      %s236 = scalar_select %p233, %s234, %s235
      %p239 = pneg %p233
      %p240 = scmp.eq.s32.totalorder %s31, 1
      %p241 = por %p239, %p240
      %p242 = scmp.ne.s32.totalorder %s234, %s237
      %p243 = scmp.eq.s32.totalorder %s31, 0
      %p244 = por %p242, %p243
      %p245 = scmp.ne.s32.totalorder %s234, %s237
      %p246 = scmp.eq.s32.totalorder %s36, 1
      %p247 = por %p245, %p246
      %p248 = scmp.ne.s32.totalorder %s237, %s238
      %p249 = scmp.eq.s32.totalorder %s36, 0
      %p250 = por %p248, %p249
      %p251 = scmp.ne.s32.totalorder %s237, %s238
      %p252 = scmp.eq.s32.totalorder %s37, 1
      %p253 = por %p251, %p252
      %p255 = scmp.ne.s32.totalorder %s238, %s254
      %p256 = scmp.eq.s32.totalorder %s37, 0
      %p257 = por %p255, %p256
      %p258 = scmp.le.s32.totalorder 1, %s31
      %p259 = scmp.lt.s32.totalorder %s31, 3
      %p260 = pnand %p258, %p259
      %p261 = pneg %p260
      // Predicated region
      $region9: #{tpu_custom_call.1} parent=5 // pred_check
        _
      $region10: #{tpu_custom_call.1} parent=5 // pred_check_branch
        %263 = sbr.rel (%p260) target = $region12
      $region11: #{tpu_custom_call.1} parent=5 // pred_region
        %s264 = ssub.s32 %s31, 1
        // Predicated region
        $region13: #{tpu_custom_call.1} parent=11 // pred_check
          %p265 = pneg %p156
        $region14: #{tpu_custom_call.1} parent=11 // pred_check_branch
          %267 = sbr.rel (%p265) target = $region16
        $region15: #{tpu_custom_call.1} parent=11 // pred_region
          %s269 = ssub.s32 5120, 5120
          %270 = vsyncadd [#allocation9], %s269
          %s271 = sshll.u32 [#allocation10], 4
          %s272 = int_to_ptr.vmem [resolvable:$true] %s271
          %277 = dma.hbm_to_vmem [thread:$0]  %s4, 5120, %s272, [#allocation9], 320, 320, 20
        $region16: #{tpu_custom_call.1} parent=11 // pred_fallthru
          _
        // Predicated region
        $region17: #{tpu_custom_call.1} parent=11 // pred_check
          %p278 = pneg %p177
        $region18: #{tpu_custom_call.1} parent=11 // pred_check_branch
          %280 = sbr.rel (%p278) target = $region20
        $region19: #{tpu_custom_call.1} parent=11 // pred_region
          %s282 = ssub.s32 5120, 5120
          %283 = vsyncadd [#allocation12], %s282
          %s284 = sshll.u32 [#allocation11], 4
          %s285 = int_to_ptr.vmem [resolvable:$true] %s284
          %290 = dma.hbm_to_vmem [thread:$0]  %s5, 5120, %s285, [#allocation12], 320, 320, 20
        $region20: #{tpu_custom_call.1} parent=11 // pred_fallthru
          _
        // Predicated region
        $region21: #{tpu_custom_call.1} parent=11 // pred_check
          %p291 = pneg %p198
        $region22: #{tpu_custom_call.1} parent=11 // pred_check_branch
          %293 = sbr.rel (%p291) target = $region24
        $region23: #{tpu_custom_call.1} parent=11 // pred_region
          _
        $region24: #{tpu_custom_call.1} parent=11 // pred_fallthru
          _
      $region12: #{tpu_custom_call.1} parent=5 // pred_fallthru
        _
      %p294 = scmp.lt.s32.totalorder %s31, 2
      // Predicated region
      $region25: #{tpu_custom_call.1} parent=5 // pred_check
        %p295 = pneg %p294
      $region26: #{tpu_custom_call.1} parent=5 // pred_check_branch
        %297 = sbr.rel (%p295) target = $region28
      $region27: #{tpu_custom_call.1} parent=5 // pred_region
        // Predicated region
        $region29: #{tpu_custom_call.1} parent=27 // pred_check
          %p298 = pneg %p51
        $region30: #{tpu_custom_call.1} parent=27 // pred_check_branch
          %300 = sbr.rel (%p298) target = $region32
        $region31: #{tpu_custom_call.1} parent=27 // pred_region
          %s301 = sand.u32 %s41, 1
          %s302 = scalar_lea.sflag [#allocation3], %s301
          %s303 = sand.u32 %s41, 1
          %s304 = smul.addr %s303, 16
          %s305 = scalar_lea.vmem [#allocation2], %s304
          %s306 = smul.u32 2, %s31
          %s307 = ssub.s32 3, %s306
          %p308 = scmp.lt.s32.totalorder %s307, 2
          %s309 = scalar_select %p308, %s307, 2
          %s310 = smul.u32 128, %s309
          %s312 = ssub.s32 256, %s310
          %313 = vsyncadd %s302, %s312
          %p314 = scmp.ne.s32.totalorder 0, %s310
          %s315 = smul.addr %s306, 128
          %s316 = scalar_lea.hbm %s0, %s315
          %s317 = smul.u32 8, %s309
          %s318 = sshll.u32 %s305, 4
          %s319 = int_to_ptr.vmem [resolvable:$true] %s318
          %s320 = sshll.u32 %s317, 4
          %324 = dma.hbm_to_vmem [thread:$0]  (%p314), %s316, %s320, %s319, %s302, 128, 128, 8
        $region32: #{tpu_custom_call.1} parent=27 // pred_fallthru
          _
        // Predicated region
        $region33: #{tpu_custom_call.1} parent=27 // pred_check
          %p325 = pneg %p77
        $region34: #{tpu_custom_call.1} parent=27 // pred_check_branch
          %327 = sbr.rel (%p325) target = $region36
        $region35: #{tpu_custom_call.1} parent=27 // pred_region
          %s328 = sand.u32 %s31, 1
          %s329 = scalar_lea.sflag [#allocation6], %s328
          %s330 = sand.u32 %s67, 1
          %s331 = smul.addr %s330, 16
          %s332 = scalar_lea.vmem [#allocation5], %s331
          %s333 = smul.u32 2, %s31
          %s334 = ssub.s32 3, %s333
          %p335 = scmp.lt.s32.totalorder %s334, 2
          %s336 = scalar_select %p335, %s334, 2
          %s337 = smul.u32 128, %s336
          %s339 = ssub.s32 256, %s337
          %340 = vsyncadd %s329, %s339
          %p341 = scmp.ne.s32.totalorder 0, %s337
          %s342 = smul.addr %s333, 128
          %s343 = scalar_lea.hbm %s1, %s342
          %s344 = smul.u32 8, %s336
          %s345 = sshll.u32 %s332, 4
          %s346 = int_to_ptr.vmem [resolvable:$true] %s345
          %s347 = sshll.u32 %s344, 4
          %351 = dma.hbm_to_vmem [thread:$0]  (%p341), %s343, %s347, %s346, %s329, 128, 128, 8
        $region36: #{tpu_custom_call.1} parent=27 // pred_fallthru
          _
        // Predicated region
        $region37: #{tpu_custom_call.1} parent=27 // pred_check
          %p352 = pneg %p103
        $region38: #{tpu_custom_call.1} parent=27 // pred_check_branch
          %354 = sbr.rel (%p352) target = $region40
        $region39: #{tpu_custom_call.1} parent=27 // pred_region
          %s355 = sand.u32 %s31, 1
          %s356 = scalar_lea.sflag [#allocation6], %s355
          %s357 = sand.u32 %s93, 1
          %s358 = smul.addr %s357, 16
          %s359 = scalar_lea.vmem [#allocation7], %s358
          %s360 = smul.u32 2, %s31
          %s361 = ssub.s32 3, %s360
          %p362 = scmp.lt.s32.totalorder %s361, 2
          %s363 = scalar_select %p362, %s361, 2
          %s364 = smul.u32 128, %s363
          %s366 = ssub.s32 256, %s364
          %367 = vsyncadd %s356, %s366
          %p368 = scmp.ne.s32.totalorder 0, %s364
          %s369 = smul.addr %s360, 128
          %s370 = scalar_lea.hbm %s2, %s369
          %s371 = smul.u32 8, %s363
          %s372 = sshll.u32 %s359, 4
          %s373 = int_to_ptr.vmem [resolvable:$true] %s372
          %s374 = sshll.u32 %s371, 4
          %378 = dma.hbm_to_vmem [thread:$0]  (%p368), %s370, %s374, %s373, %s356, 128, 128, 8
        $region40: #{tpu_custom_call.1} parent=27 // pred_fallthru
          _
        // Predicated region
        $region41: #{tpu_custom_call.1} parent=27 // pred_check
          %p379 = pneg %p129
        $region42: #{tpu_custom_call.1} parent=27 // pred_check_branch
          %381 = sbr.rel (%p379) target = $region44
        $region43: #{tpu_custom_call.1} parent=27 // pred_region
          %s382 = sand.u32 %s31, 1
          %s383 = scalar_lea.sflag [#allocation9], %s382
          %s384 = sand.u32 %s119, 1
          %s385 = smul.addr %s384, 16
          %s386 = scalar_lea.vmem [#allocation8], %s385
          %s387 = smul.u32 2, %s31
          %s388 = ssub.s32 3, %s387
          %p389 = scmp.lt.s32.totalorder %s388, 2
          %s390 = scalar_select %p389, %s388, 2
          %s391 = smul.u32 128, %s390
          %s393 = ssub.s32 256, %s391
          %394 = vsyncadd %s383, %s393
          %p395 = scmp.ne.s32.totalorder 0, %s391
          %s396 = smul.addr %s387, 128
          %s397 = scalar_lea.hbm %s3, %s396
          %s398 = smul.u32 8, %s390
          %s399 = sshll.u32 %s386, 4
          %s400 = int_to_ptr.vmem [resolvable:$true] %s399
          %s401 = sshll.u32 %s398, 4
          %405 = dma.hbm_to_vmem [thread:$0]  (%p395), %s397, %s401, %s400, %s383, 128, 128, 8
        $region44: #{tpu_custom_call.1} parent=27 // pred_fallthru
          _
      $region28: #{tpu_custom_call.1} parent=5 // pred_fallthru
        _
      %p406 = scmp.le.s32.totalorder 1, %s31
      %p407 = scmp.lt.s32.totalorder %s31, 3
      %p408 = pnand %p406, %p407
      %p409 = pneg %p408
      // Predicated region
      $region45: #{tpu_custom_call.1} parent=5 // pred_check
        _
      $region46: #{tpu_custom_call.1} parent=5 // pred_check_branch
        %411 = sbr.rel (%p408) target = $region48
      $region47: #{tpu_custom_call.1} parent=5 // pred_region
        %s412 = ssub.s32 %s31, 1
        %s413 = sand.u32 %s44, 1
        %s414 = scalar_lea.sflag [#allocation3], %s413
        %s415 = sand.u32 %s44, 1
        %s416 = smul.addr %s415, 16
        %s417 = scalar_lea.vmem [#allocation2], %s416
        // Predicated region
        $region49: #{tpu_custom_call.1} parent=47 // pred_check
          %p418 = pneg %p57
        $region50: #{tpu_custom_call.1} parent=47 // pred_check_branch
          %420 = sbr.rel (%p418) target = $region52
        $region51: #{tpu_custom_call.1} parent=47 // pred_region
          %421 = dma.done %s414, 256
        $region52: #{tpu_custom_call.1} parent=47 // pred_fallthru
          _
        %s422 = sand.u32 %s36, 1
        %s423 = scalar_lea.sflag [#allocation6], %s422
        %s424 = sand.u32 %s70, 1
        %s425 = smul.addr %s424, 16
        %s426 = scalar_lea.vmem [#allocation5], %s425
        // Predicated region
        $region53: #{tpu_custom_call.1} parent=47 // pred_check
          %p427 = pneg %p83
        $region54: #{tpu_custom_call.1} parent=47 // pred_check_branch
          %429 = sbr.rel (%p427) target = $region56
        $region55: #{tpu_custom_call.1} parent=47 // pred_region
          %430 = dma.done %s423, 256
        $region56: #{tpu_custom_call.1} parent=47 // pred_fallthru
          _
        %s431 = sand.u32 %s36, 1
        %s432 = scalar_lea.sflag [#allocation6], %s431
        %s433 = sand.u32 %s96, 1
        %s434 = smul.addr %s433, 16
        %s435 = scalar_lea.vmem [#allocation7], %s434
        // Predicated region
        $region57: #{tpu_custom_call.1} parent=47 // pred_check
          %p436 = pneg %p109
        $region58: #{tpu_custom_call.1} parent=47 // pred_check_branch
          %438 = sbr.rel (%p436) target = $region60
        $region59: #{tpu_custom_call.1} parent=47 // pred_region
          %439 = dma.done %s432, 256
        $region60: #{tpu_custom_call.1} parent=47 // pred_fallthru
          _
        %s440 = sand.u32 %s36, 1
        %s441 = scalar_lea.sflag [#allocation9], %s440
        %s442 = sand.u32 %s122, 1
        %s443 = smul.addr %s442, 16
        %s444 = scalar_lea.vmem [#allocation8], %s443
        // Predicated region
        $region61: #{tpu_custom_call.1} parent=47 // pred_check
          %p445 = pneg %p135
        $region62: #{tpu_custom_call.1} parent=47 // pred_check_branch
          %447 = sbr.rel (%p445) target = $region64
        $region63: #{tpu_custom_call.1} parent=47 // pred_region
          %448 = dma.done %s441, 256
        $region64: #{tpu_custom_call.1} parent=47 // pred_fallthru
          _
        // Predicated region
        $region65: #{tpu_custom_call.1} parent=47 // pred_check
          %p449 = pneg %p156
        $region66: #{tpu_custom_call.1} parent=47 // pred_check_branch
          %451 = sbr.rel (%p449) target = $region68
        $region67: #{tpu_custom_call.1} parent=47 // pred_region
          %452 = dma.done [#allocation9], 5120
        $region68: #{tpu_custom_call.1} parent=47 // pred_fallthru
          _
        // Predicated region
        $region69: #{tpu_custom_call.1} parent=47 // pred_check
          %p453 = pneg %p177
        $region70: #{tpu_custom_call.1} parent=47 // pred_check_branch
          %455 = sbr.rel (%p453) target = $region72
        $region71: #{tpu_custom_call.1} parent=47 // pred_region
          %456 = dma.done [#allocation12], 5120
        $region72: #{tpu_custom_call.1} parent=47 // pred_fallthru
          _
        %s457 = sand.u32 %s44, 1
        %s458 = scalar_lea.sflag [#allocation3], %s457
        %s459 = sand.u32 %s44, 1
        %s460 = smul.addr %s459, 16
        %s461 = scalar_lea.vmem [#allocation2], %s460
        %p462 = pneg %p57
        %p463 = pneg %p54
        %s464 = sand.u32 %s36, 1
        %s465 = scalar_lea.sflag [#allocation6], %s464
        %s466 = sand.u32 %s70, 1
        %s467 = smul.addr %s466, 16
        %s468 = scalar_lea.vmem [#allocation5], %s467
        %p469 = pneg %p83
        %p470 = pneg %p80
        %s471 = sand.u32 %s36, 1
        %s472 = scalar_lea.sflag [#allocation6], %s471
        %s473 = sand.u32 %s96, 1
        %s474 = smul.addr %s473, 16
        %s475 = scalar_lea.vmem [#allocation7], %s474
        %p476 = pneg %p109
        %p477 = pneg %p106
        %s478 = sand.u32 %s36, 1
        %s479 = scalar_lea.sflag [#allocation9], %s478
        %s480 = sand.u32 %s122, 1
        %s481 = smul.addr %s480, 16
        %s482 = scalar_lea.vmem [#allocation8], %s481
        %p483 = pneg %p135
        %p484 = pneg %p132
        %p485 = pneg %p156
        %p486 = pneg %p153
        %p487 = pneg %p177
        %p488 = pneg %p174
        %p489 = pneg %p198
        %p490 = pneg %p195
        %p491 = pneg %p224
        %p492 = pneg %p221
        %s493 = sand.u32 %s211, 1
        %s494 = scalar_lea.sflag [#allocation4], %s493
        %s495 = sand.u32 %s211, 1
        %s496 = smul.addr %s495, 16
        %s497 = scalar_lea.vmem [#allocation13], %s496
        %p498 = pneg %p250
        %p499 = pneg %p247
        %s500 = sand.u32 %s237, 1
        %s501 = scalar_lea.sflag [#allocation15], %s500
        %s502 = sand.u32 %s237, 1
        %s503 = smul.addr %s502, 16
        %s504 = scalar_lea.vmem [#allocation14], %s503
        %s505 = smul.u32 2, %s36
        %s506 = ssub.s32 3, %s505
        %p507 = scmp.lt.s32.totalorder %s506, 2
        %s508 = scalar_select %p507, %s506, 2
        %s509 = smul.u32 128, %s508
        %s510 = smul.u32 2, %s36
        %s511 = ssub.s32 3, %s510
        %p512 = scmp.lt.s32.totalorder %s511, 2
        %s513 = scalar_select %p512, %s511, 2
        %s514 = smul.u32 128, %s513
        %s515 = smul.u32 2, %s36
        %s516 = ssub.s32 3, %s515
        %p517 = scmp.lt.s32.totalorder %s516, 2
        %s518 = scalar_select %p517, %s516, 2
        %s519 = smul.u32 128, %s518
        %s520 = smul.u32 2, %s36
        %s521 = ssub.s32 3, %s520
        %p522 = scmp.lt.s32.totalorder %s521, 2
        %s523 = scalar_select %p522, %s521, 2
        %s524 = smul.u32 128, %s523
        %s525 = smul.u32 2, %s36
        %s526 = ssub.s32 3, %s525
        %p527 = scmp.lt.s32.totalorder %s526, 2
        %s528 = scalar_select %p527, %s526, 2
        %s529 = smul.u32 128, %s528
        %s530 = smul.u32 2, %s36
        %s531 = ssub.s32 3, %s530
        %p532 = scmp.lt.s32.totalorder %s531, 2
        %s533 = scalar_select %p532, %s531, 2
        %s534 = smul.u32 128, %s533
        %v536 = vld [vmem:[%s417] sm:$0xff]
        %v537 = vld [vmem:[%s417 + $0x8] sm:$0xff]
        %v538 = vpack.c.bf16 %v537, %v536
        %v539 = vld [vmem:[#allocation10] sm:$0xff]
        %v540 = vld [vmem:[#allocation10 + $0x8] sm:$0xff]
        %v541 = vld [vmem:[#allocation10 + $0x10] sm:$0xf]
        %v542 = vld [vmem:[#allocation10 + $0x14] sm:$0xff]
        %v543 = vld [vmem:[#allocation10 + $0x1c] sm:$0xff]
        %v544 = vld [vmem:[#allocation10 + $0x24] sm:$0xf]
        %v545 = vld [vmem:[#allocation10 + $0x28] sm:$0xff]
        %v546 = vld [vmem:[#allocation10 + $0x30] sm:$0xff]
        %v547 = vld [vmem:[#allocation10 + $0x38] sm:$0xf]
        %v548 = vld [vmem:[#allocation10 + $0x3c] sm:$0xff]
        %v549 = vld [vmem:[#allocation10 + $0x44] sm:$0xff]
        %v550 = vld [vmem:[#allocation10 + $0x4c] sm:$0xf]
        %v551 = vld [vmem:[#allocation10 + $0x50] sm:$0xff]
        %v552 = vld [vmem:[#allocation10 + $0x58] sm:$0xff]
        %v553 = vld [vmem:[#allocation10 + $0x60] sm:$0xf]
        %v554 = vld [vmem:[#allocation10 + $0x64] sm:$0xff]
        %v555 = vld [vmem:[#allocation10 + $0x6c] sm:$0xff]
        %v556 = vld [vmem:[#allocation10 + $0x74] sm:$0xf]
        %v557 = vld [vmem:[#allocation10 + $0x78] sm:$0xff]
        %v558 = vld [vmem:[#allocation10 + $0x80] sm:$0xff]
        %v559 = vld [vmem:[#allocation10 + $0x88] sm:$0xf]
        %v560 = vld [vmem:[#allocation10 + $0x8c] sm:$0xff]
        %v561 = vld [vmem:[#allocation10 + $0x94] sm:$0xff]
        %v562 = vld [vmem:[#allocation10 + $0x9c] sm:$0xf]
        %v563 = vld [vmem:[#allocation10 + $0xa0] sm:$0xff]
        %v564 = vld [vmem:[#allocation10 + $0xa8] sm:$0xff]
        %v565 = vld [vmem:[#allocation10 + $0xb0] sm:$0xf]
        %v566 = vld [vmem:[#allocation10 + $0xb4] sm:$0xff]
        %v567 = vld [vmem:[#allocation10 + $0xbc] sm:$0xff]
        %v568 = vld [vmem:[#allocation10 + $0xc4] sm:$0xf]
        %v569 = vld [vmem:[#allocation10 + $0xc8] sm:$0xff]
        %v570 = vld [vmem:[#allocation10 + $0xd0] sm:$0xff]
        %v571 = vld [vmem:[#allocation10 + $0xd8] sm:$0xf]
        %v572 = vld [vmem:[#allocation10 + $0xdc] sm:$0xff]
        %v573 = vld [vmem:[#allocation10 + $0xe4] sm:$0xff]
        %v574 = vld [vmem:[#allocation10 + $0xec] sm:$0xf]
        %v575 = vld [vmem:[#allocation10 + $0xf0] sm:$0xff]
        %v576 = vld [vmem:[#allocation10 + $0xf8] sm:$0xff]
        %v577 = vld [vmem:[#allocation10 + $0x100] sm:$0xf]
        %v578 = vld [vmem:[#allocation10 + $0x104] sm:$0xff]
        %v579 = vld [vmem:[#allocation10 + $0x10c] sm:$0xff]
        %v580 = vld [vmem:[#allocation10 + $0x114] sm:$0xf]
        %v581 = vld [vmem:[#allocation10 + $0x118] sm:$0xff]
        %v582 = vld [vmem:[#allocation10 + $0x120] sm:$0xff]
        %v583 = vld [vmem:[#allocation10 + $0x128] sm:$0xf]
        %v584 = vld [vmem:[#allocation10 + $0x12c] sm:$0xff]
        %v585 = vld [vmem:[#allocation10 + $0x134] sm:$0xff]
        %v586 = vld [vmem:[#allocation10 + $0x13c] sm:$0xf]
        %v587 = vld [vmem:[%s426] sm:$0xff]
        %v588 = vld [vmem:[%s426 + $0x8] sm:$0xff]
        %v589 = vpack.c.bf16 %v588, %v587
        %v590 = vld [vmem:[#allocation11] sm:$0xff]
        %v591 = vld [vmem:[#allocation11 + $0x8] sm:$0xff]
        %v592 = vld [vmem:[#allocation11 + $0x10] sm:$0xf]
        %v593 = vld [vmem:[#allocation11 + $0x14] sm:$0xff]
        %v594 = vld [vmem:[#allocation11 + $0x1c] sm:$0xff]
        %v595 = vld [vmem:[#allocation11 + $0x24] sm:$0xf]
        %v596 = vld [vmem:[#allocation11 + $0x28] sm:$0xff]
        %v597 = vld [vmem:[#allocation11 + $0x30] sm:$0xff]
        %v598 = vld [vmem:[#allocation11 + $0x38] sm:$0xf]
        %v599 = vld [vmem:[#allocation11 + $0x3c] sm:$0xff]
        %v600 = vld [vmem:[#allocation11 + $0x44] sm:$0xff]
        %v601 = vld [vmem:[#allocation11 + $0x4c] sm:$0xf]
        %v602 = vld [vmem:[#allocation11 + $0x50] sm:$0xff]
        %v603 = vld [vmem:[#allocation11 + $0x58] sm:$0xff]
        %v604 = vld [vmem:[#allocation11 + $0x60] sm:$0xf]
        %v605 = vld [vmem:[#allocation11 + $0x64] sm:$0xff]
        %v606 = vld [vmem:[#allocation11 + $0x6c] sm:$0xff]
        %v607 = vld [vmem:[#allocation11 + $0x74] sm:$0xf]
        %v608 = vld [vmem:[#allocation11 + $0x78] sm:$0xff]
        %v609 = vld [vmem:[#allocation11 + $0x80] sm:$0xff]
        %v610 = vld [vmem:[#allocation11 + $0x88] sm:$0xf]
        %v611 = vld [vmem:[#allocation11 + $0x8c] sm:$0xff]
        %v612 = vld [vmem:[#allocation11 + $0x94] sm:$0xff]
        %v613 = vld [vmem:[#allocation11 + $0x9c] sm:$0xf]
        %v614 = vld [vmem:[#allocation11 + $0xa0] sm:$0xff]
        %v615 = vld [vmem:[#allocation11 + $0xa8] sm:$0xff]
        %v616 = vld [vmem:[#allocation11 + $0xb0] sm:$0xf]
        %v617 = vld [vmem:[#allocation11 + $0xb4] sm:$0xff]
        %v618 = vld [vmem:[#allocation11 + $0xbc] sm:$0xff]
        %v619 = vld [vmem:[#allocation11 + $0xc4] sm:$0xf]
        %v620 = vld [vmem:[#allocation11 + $0xc8] sm:$0xff]
        %v621 = vld [vmem:[#allocation11 + $0xd0] sm:$0xff]
        %v622 = vld [vmem:[#allocation11 + $0xd8] sm:$0xf]
        %v623 = vld [vmem:[#allocation11 + $0xdc] sm:$0xff]
        %v624 = vld [vmem:[#allocation11 + $0xe4] sm:$0xff]
        %v625 = vld [vmem:[#allocation11 + $0xec] sm:$0xf]
        %v626 = vld [vmem:[#allocation11 + $0xf0] sm:$0xff]
        %v627 = vld [vmem:[#allocation11 + $0xf8] sm:$0xff]
        %v628 = vld [vmem:[#allocation11 + $0x100] sm:$0xf]
        %v629 = vld [vmem:[#allocation11 + $0x104] sm:$0xff]
        %v630 = vld [vmem:[#allocation11 + $0x10c] sm:$0xff]
        %v631 = vld [vmem:[#allocation11 + $0x114] sm:$0xf]
        %v632 = vld [vmem:[#allocation11 + $0x118] sm:$0xff]
        %v633 = vld [vmem:[#allocation11 + $0x120] sm:$0xff]
        %v634 = vld [vmem:[#allocation11 + $0x128] sm:$0xf]
        %v635 = vld [vmem:[#allocation11 + $0x12c] sm:$0xff]
        %v636 = vld [vmem:[#allocation11 + $0x134] sm:$0xff]
        %v637 = vld [vmem:[#allocation11 + $0x13c] sm:$0xf]
        %v686 = vunpack.c.l.b16 %v590
        %v687 = vunpack.c.h.b16 %v590
        %v688 = vunpack.c.l.b16 %v591
        %v689 = vunpack.c.h.b16 %v591
        %v690 = vunpack.c.l.b16 %v592
        %v691 = vunpack.c.l.b16 %v593
        %v692 = vunpack.c.h.b16 %v593
        %v693 = vunpack.c.l.b16 %v594
        %v694 = vunpack.c.h.b16 %v594
        %v695 = vunpack.c.l.b16 %v595
        %v696 = vunpack.c.l.b16 %v596
        %v697 = vunpack.c.h.b16 %v596
        %v698 = vunpack.c.l.b16 %v597
        %v699 = vunpack.c.h.b16 %v597
        %v700 = vunpack.c.l.b16 %v598
        %v701 = vunpack.c.l.b16 %v599
        %v702 = vunpack.c.h.b16 %v599
        %v703 = vunpack.c.l.b16 %v600
        %v704 = vunpack.c.h.b16 %v600
        %v705 = vunpack.c.l.b16 %v601
        %v706 = vunpack.c.l.b16 %v602
        %v707 = vunpack.c.h.b16 %v602
        %v708 = vunpack.c.l.b16 %v603
        %v709 = vunpack.c.h.b16 %v603
        %v710 = vunpack.c.l.b16 %v604
        %v711 = vunpack.c.l.b16 %v605
        %v712 = vunpack.c.h.b16 %v605
        %v713 = vunpack.c.l.b16 %v606
        %v714 = vunpack.c.h.b16 %v606
        %v715 = vunpack.c.l.b16 %v607
        %v716 = vunpack.c.l.b16 %v608
        %v717 = vunpack.c.h.b16 %v608
        %v718 = vunpack.c.l.b16 %v609
        %v719 = vunpack.c.h.b16 %v609
        %v720 = vunpack.c.l.b16 %v610
        %v721 = vunpack.c.l.b16 %v611
        %v722 = vunpack.c.h.b16 %v611
        %v723 = vunpack.c.l.b16 %v612
        %v724 = vunpack.c.h.b16 %v612
        %v725 = vunpack.c.l.b16 %v613
        %v726 = vunpack.c.l.b16 %v614
        %v727 = vunpack.c.h.b16 %v614
        %v728 = vunpack.c.l.b16 %v615
        %v729 = vunpack.c.h.b16 %v615
        %v730 = vunpack.c.l.b16 %v616
        %v731 = vunpack.c.l.b16 %v617
        %v732 = vunpack.c.h.b16 %v617
        %v733 = vunpack.c.l.b16 %v618
        %v734 = vunpack.c.h.b16 %v618
        %v735 = vunpack.c.l.b16 %v619
        %v736 = vunpack.c.l.b16 %v620
        %v737 = vunpack.c.h.b16 %v620
        %v738 = vunpack.c.l.b16 %v621
        %v739 = vunpack.c.h.b16 %v621
        %v740 = vunpack.c.l.b16 %v622
        %v741 = vunpack.c.l.b16 %v623
        %v742 = vunpack.c.h.b16 %v623
        %v743 = vunpack.c.l.b16 %v624
        %v744 = vunpack.c.h.b16 %v624
        %v745 = vunpack.c.l.b16 %v625
        %v746 = vunpack.c.l.b16 %v626
        %v747 = vunpack.c.h.b16 %v626
        %v748 = vunpack.c.l.b16 %v627
        %v749 = vunpack.c.h.b16 %v627
        %v750 = vunpack.c.l.b16 %v628
        %v751 = vunpack.c.l.b16 %v629
        %v752 = vunpack.c.h.b16 %v629
        %v753 = vunpack.c.l.b16 %v630
        %v754 = vunpack.c.h.b16 %v630
        %v755 = vunpack.c.l.b16 %v631
        %v756 = vunpack.c.l.b16 %v632
        %v757 = vunpack.c.h.b16 %v632
        %v758 = vunpack.c.l.b16 %v633
        %v759 = vunpack.c.h.b16 %v633
        %v760 = vunpack.c.l.b16 %v634
        %v761 = vunpack.c.l.b16 %v635
        %v762 = vunpack.c.h.b16 %v635
        %v763 = vunpack.c.l.b16 %v636
        %v764 = vunpack.c.h.b16 %v636
        %v765 = vunpack.c.l.b16 %v637
        %v766 = vpack.c.b16 %v691, %v686
        %v767 = vpack.c.b16 %v692, %v687
        %v768 = vpack.c.b16 %v693, %v688
        %v769 = vpack.c.b16 %v694, %v689
        %v770 = vpack.c.b16 %v695, %v690
        %v771 = vpack.c.b16 %v701, %v696
        %v772 = vpack.c.b16 %v702, %v697
        %v773 = vpack.c.b16 %v703, %v698
        %v774 = vpack.c.b16 %v704, %v699
        %v775 = vpack.c.b16 %v705, %v700
        %v776 = vpack.c.b16 %v711, %v706
        %v777 = vpack.c.b16 %v712, %v707
        %v778 = vpack.c.b16 %v713, %v708
        %v779 = vpack.c.b16 %v714, %v709
        %v780 = vpack.c.b16 %v715, %v710
        %v781 = vpack.c.b16 %v721, %v716
        %v782 = vpack.c.b16 %v722, %v717
        %v783 = vpack.c.b16 %v723, %v718
        %v784 = vpack.c.b16 %v724, %v719
        %v785 = vpack.c.b16 %v725, %v720
        %v786 = vpack.c.b16 %v731, %v726
        %v787 = vpack.c.b16 %v732, %v727
        %v788 = vpack.c.b16 %v733, %v728
        %v789 = vpack.c.b16 %v734, %v729
        %v790 = vpack.c.b16 %v735, %v730
        %v791 = vpack.c.b16 %v741, %v736
        %v792 = vpack.c.b16 %v742, %v737
        %v793 = vpack.c.b16 %v743, %v738
        %v794 = vpack.c.b16 %v744, %v739
        %v795 = vpack.c.b16 %v745, %v740
        %v796 = vpack.c.b16 %v751, %v746
        %v797 = vpack.c.b16 %v752, %v747
        %v798 = vpack.c.b16 %v753, %v748
        %v799 = vpack.c.b16 %v754, %v749
        %v800 = vpack.c.b16 %v755, %v750
        %v801 = vpack.c.b16 %v761, %v756
        %v802 = vpack.c.b16 %v762, %v757
        %v803 = vpack.c.b16 %v763, %v758
        %v804 = vpack.c.b16 %v764, %v759
        %v805 = vpack.c.b16 %v765, %v760
        %846 = vmatprep.subr.bf16.mxu0 %v767
        %847 = vmatpush1.bf16.msra.mxu0 %v766
        %848 = vmatprep.subr.bf16.mxu0 %v772
        %849 = vmatpush1.bf16.msra.mxu0 %v771
        %850 = vmatprep.subr.bf16.mxu0 %v777
        %851 = vmatpush1.bf16.msra.mxu0 %v776
        %852 = vmatprep.subr.bf16.mxu0 %v782
        %853 = vmatpush1.bf16.msra.mxu0 %v781
        %854 = vmatprep.subr.bf16.mxu0 %v787
        %855 = vmatpush1.bf16.msra.mxu0 %v786
        %856 = vmatprep.subr.bf16.mxu0 %v792
        %857 = vmatpush1.bf16.msra.mxu0 %v791
        %858 = vmatprep.subr.bf16.mxu0 %v797
        %859 = vmatpush1.bf16.msra.mxu0 %v796
        %860 = vmatprep.subr.bf16.mxu0 %v802
        %861 = vmatpush1.bf16.msra.mxu0 %v801
        %862 = vmatprep.subr.bf16.mxu0 0
        %863 = vmatpush1.bf16.msra.mxu0 0
        %864 = vmatprep.subr.bf16.mxu0 0
        %865 = vmatpush1.bf16.msra.mxu0 0
        %866 = vmatprep.subr.bf16.mxu0 0
        %867 = vmatpush1.bf16.msra.mxu0 0
        %868 = vmatprep.subr.bf16.mxu0 0
        %869 = vmatpush1.bf16.msra.mxu0 0
        %870 = vmatprep.subr.bf16.mxu0 0
        %871 = vmatpush1.bf16.msra.mxu0 0
        %872 = vmatprep.subr.bf16.mxu0 0
        %873 = vmatpush1.bf16.msra.mxu0 0
        %874 = vmatprep.subr.bf16.mxu0 0
        %875 = vmatpush1.bf16.msra.mxu0 0
        %876 = vmatprep.subr.bf16.mxu0 0
        %877 = vmatpush1.bf16.msra.mxu0 0
        %878 = vmatprep.mubr.bf16.mxu0 0
        %879 = vmatmul.mubr.bf16.gmra.mrb[0].mxu0 %v589
        %v880 = vpop.f32.mrb[0].mxu0
        %v881 = vadd.f32 0.0, %v880
        %v882 = vpop.f32.mrb[0].mxu0
        %v883 = vadd.f32 0.0, %v882
        %v884 = vpop.f32.mrb[0].mxu0
        %v885 = vadd.f32 0.0, %v884
        %v886 = vpop.f32.mrb[0].mxu0
        %v887 = vadd.f32 0.0, %v886
        %888 = vdwg.mxu0
        %889 = vmatprep.subr.bf16.mxu0 %v769
        %890 = vmatpush1.bf16.msra.mxu0 %v768
        %891 = vmatprep.subr.bf16.mxu0 %v774
        %892 = vmatpush1.bf16.msra.mxu0 %v773
        %893 = vmatprep.subr.bf16.mxu0 %v779
        %894 = vmatpush1.bf16.msra.mxu0 %v778
        %895 = vmatprep.subr.bf16.mxu0 %v784
        %896 = vmatpush1.bf16.msra.mxu0 %v783
        %897 = vmatprep.subr.bf16.mxu0 %v789
        %898 = vmatpush1.bf16.msra.mxu0 %v788
        %899 = vmatprep.subr.bf16.mxu0 %v794
        %900 = vmatpush1.bf16.msra.mxu0 %v793
        %901 = vmatprep.subr.bf16.mxu0 %v799
        %902 = vmatpush1.bf16.msra.mxu0 %v798
        %903 = vmatprep.subr.bf16.mxu0 %v804
        %904 = vmatpush1.bf16.msra.mxu0 %v803
        %905 = vmatprep.subr.bf16.mxu0 0
        %906 = vmatpush1.bf16.msra.mxu0 0
        %907 = vmatprep.subr.bf16.mxu0 0
        %908 = vmatpush1.bf16.msra.mxu0 0
        %909 = vmatprep.subr.bf16.mxu0 0
        %910 = vmatpush1.bf16.msra.mxu0 0
        %911 = vmatprep.subr.bf16.mxu0 0
        %912 = vmatpush1.bf16.msra.mxu0 0
        %913 = vmatprep.subr.bf16.mxu0 0
        %914 = vmatpush1.bf16.msra.mxu0 0
        %915 = vmatprep.subr.bf16.mxu0 0
        %916 = vmatpush1.bf16.msra.mxu0 0
        %917 = vmatprep.subr.bf16.mxu0 0
        %918 = vmatpush1.bf16.msra.mxu0 0
        %919 = vmatprep.subr.bf16.mxu0 0
        %920 = vmatpush1.bf16.msra.mxu0 0
        %921 = vmatprep.mubr.bf16.mxu0 0
        %922 = vmatmul.mubr.bf16.gmra.mrb[0].mxu0 %v589
        %v923 = vpop.f32.mrb[0].mxu0
        %v924 = vadd.f32 0.0, %v923
        %v925 = vpop.f32.mrb[0].mxu0
        %v926 = vadd.f32 0.0, %v925
        %v927 = vpop.f32.mrb[0].mxu0
        %v928 = vadd.f32 0.0, %v927
        %v929 = vpop.f32.mrb[0].mxu0
        %v930 = vadd.f32 0.0, %v929
        %931 = vdwg.mxu0
        %932 = vmatprep.subr.bf16.mxu0 0
        %933 = vmatpush1.bf16.msra.mxu0 %v770
        %934 = vmatprep.subr.bf16.mxu0 0
        %935 = vmatpush1.bf16.msra.mxu0 %v775
        %936 = vmatprep.subr.bf16.mxu0 0
        %937 = vmatpush1.bf16.msra.mxu0 %v780
        %938 = vmatprep.subr.bf16.mxu0 0
        %939 = vmatpush1.bf16.msra.mxu0 %v785
        %940 = vmatprep.subr.bf16.mxu0 0
        %941 = vmatpush1.bf16.msra.mxu0 %v790
        %942 = vmatprep.subr.bf16.mxu0 0
        %943 = vmatpush1.bf16.msra.mxu0 %v795
        %944 = vmatprep.subr.bf16.mxu0 0
        %945 = vmatpush1.bf16.msra.mxu0 %v800
        %946 = vmatprep.subr.bf16.mxu0 0
        %947 = vmatpush1.bf16.msra.mxu0 %v805
        %948 = vmatprep.subr.bf16.mxu0 0
        %949 = vmatpush1.bf16.msra.mxu0 0
        %950 = vmatprep.subr.bf16.mxu0 0
        %951 = vmatpush1.bf16.msra.mxu0 0
        %952 = vmatprep.subr.bf16.mxu0 0
        %953 = vmatpush1.bf16.msra.mxu0 0
        %954 = vmatprep.subr.bf16.mxu0 0
        %955 = vmatpush1.bf16.msra.mxu0 0
        %956 = vmatprep.subr.bf16.mxu0 0
        %957 = vmatpush1.bf16.msra.mxu0 0
        %958 = vmatprep.subr.bf16.mxu0 0
        %959 = vmatpush1.bf16.msra.mxu0 0
        %960 = vmatprep.subr.bf16.mxu0 0
        %961 = vmatpush1.bf16.msra.mxu0 0
        %962 = vmatprep.subr.bf16.mxu0 0
        %963 = vmatpush1.bf16.msra.mxu0 0
        %964 = vmatprep.mubr.bf16.mxu0 0
        %965 = vmatmul.mubr.bf16.gmra.mrb[0].mxu0 %v589
        %v966 = vpop.f32.mrb[0].mxu0
        %v967 = vadd.f32 0.0, %v966
        %v968 = vpop.f32.mrb[0].mxu0
        %v969 = vpop.f32.mrb[0].mxu0
        %v970 = vadd.f32 0.0, %v969
        %v971 = vpop.f32.mrb[0].mxu0
        %972 = vdwg.mxu0
        %v1021 = vunpack.c.l.b16 %v539
        %v1022 = vunpack.c.h.b16 %v539
        %v1023 = vunpack.c.l.b16 %v540
        %v1024 = vunpack.c.h.b16 %v540
        %v1025 = vunpack.c.l.b16 %v541
        %v1026 = vunpack.c.l.b16 %v542
        %v1027 = vunpack.c.h.b16 %v542
        %v1028 = vunpack.c.l.b16 %v543
        %v1029 = vunpack.c.h.b16 %v543
        %v1030 = vunpack.c.l.b16 %v544
        %v1031 = vunpack.c.l.b16 %v545
        %v1032 = vunpack.c.h.b16 %v545
        %v1033 = vunpack.c.l.b16 %v546
        %v1034 = vunpack.c.h.b16 %v546
        %v1035 = vunpack.c.l.b16 %v547
        %v1036 = vunpack.c.l.b16 %v548
        %v1037 = vunpack.c.h.b16 %v548
        %v1038 = vunpack.c.l.b16 %v549
        %v1039 = vunpack.c.h.b16 %v549
        %v1040 = vunpack.c.l.b16 %v550
        %v1041 = vunpack.c.l.b16 %v551
        %v1042 = vunpack.c.h.b16 %v551
        %v1043 = vunpack.c.l.b16 %v552
        %v1044 = vunpack.c.h.b16 %v552
        %v1045 = vunpack.c.l.b16 %v553
        %v1046 = vunpack.c.l.b16 %v554
        %v1047 = vunpack.c.h.b16 %v554
        %v1048 = vunpack.c.l.b16 %v555
        %v1049 = vunpack.c.h.b16 %v555
        %v1050 = vunpack.c.l.b16 %v556
        %v1051 = vunpack.c.l.b16 %v557
        %v1052 = vunpack.c.h.b16 %v557
        %v1053 = vunpack.c.l.b16 %v558
        %v1054 = vunpack.c.h.b16 %v558
        %v1055 = vunpack.c.l.b16 %v559
        %v1056 = vunpack.c.l.b16 %v560
        %v1057 = vunpack.c.h.b16 %v560
        %v1058 = vunpack.c.l.b16 %v561
        %v1059 = vunpack.c.h.b16 %v561
        %v1060 = vunpack.c.l.b16 %v562
        %v1061 = vunpack.c.l.b16 %v563
        %v1062 = vunpack.c.h.b16 %v563
        %v1063 = vunpack.c.l.b16 %v564
        %v1064 = vunpack.c.h.b16 %v564
        %v1065 = vunpack.c.l.b16 %v565
        %v1066 = vunpack.c.l.b16 %v566
        %v1067 = vunpack.c.h.b16 %v566
        %v1068 = vunpack.c.l.b16 %v567
        %v1069 = vunpack.c.h.b16 %v567
        %v1070 = vunpack.c.l.b16 %v568
        %v1071 = vunpack.c.l.b16 %v569
        %v1072 = vunpack.c.h.b16 %v569
        %v1073 = vunpack.c.l.b16 %v570
        %v1074 = vunpack.c.h.b16 %v570
        %v1075 = vunpack.c.l.b16 %v571
        %v1076 = vunpack.c.l.b16 %v572
        %v1077 = vunpack.c.h.b16 %v572
        %v1078 = vunpack.c.l.b16 %v573
        %v1079 = vunpack.c.h.b16 %v573
        %v1080 = vunpack.c.l.b16 %v574
        %v1081 = vunpack.c.l.b16 %v575
        %v1082 = vunpack.c.h.b16 %v575
        %v1083 = vunpack.c.l.b16 %v576
        %v1084 = vunpack.c.h.b16 %v576
        %v1085 = vunpack.c.l.b16 %v577
        %v1086 = vunpack.c.l.b16 %v578
        %v1087 = vunpack.c.h.b16 %v578
        %v1088 = vunpack.c.l.b16 %v579
        %v1089 = vunpack.c.h.b16 %v579
        %v1090 = vunpack.c.l.b16 %v580
        %v1091 = vunpack.c.l.b16 %v581
        %v1092 = vunpack.c.h.b16 %v581
        %v1093 = vunpack.c.l.b16 %v582
        %v1094 = vunpack.c.h.b16 %v582
        %v1095 = vunpack.c.l.b16 %v583
        %v1096 = vunpack.c.l.b16 %v584
        %v1097 = vunpack.c.h.b16 %v584
        %v1098 = vunpack.c.l.b16 %v585
        %v1099 = vunpack.c.h.b16 %v585
        %v1100 = vunpack.c.l.b16 %v586
        %v1101 = vpack.c.b16 %v1026, %v1021
        %v1102 = vpack.c.b16 %v1027, %v1022
        %v1103 = vpack.c.b16 %v1028, %v1023
        %v1104 = vpack.c.b16 %v1029, %v1024
        %v1105 = vpack.c.b16 %v1030, %v1025
        %v1106 = vpack.c.b16 %v1036, %v1031
        %v1107 = vpack.c.b16 %v1037, %v1032
        %v1108 = vpack.c.b16 %v1038, %v1033
        %v1109 = vpack.c.b16 %v1039, %v1034
        %v1110 = vpack.c.b16 %v1040, %v1035
        %v1111 = vpack.c.b16 %v1046, %v1041
        %v1112 = vpack.c.b16 %v1047, %v1042
        %v1113 = vpack.c.b16 %v1048, %v1043
        %v1114 = vpack.c.b16 %v1049, %v1044
        %v1115 = vpack.c.b16 %v1050, %v1045
        %v1116 = vpack.c.b16 %v1056, %v1051
        %v1117 = vpack.c.b16 %v1057, %v1052
        %v1118 = vpack.c.b16 %v1058, %v1053
        %v1119 = vpack.c.b16 %v1059, %v1054
        %v1120 = vpack.c.b16 %v1060, %v1055
        %v1121 = vpack.c.b16 %v1066, %v1061
        %v1122 = vpack.c.b16 %v1067, %v1062
        %v1123 = vpack.c.b16 %v1068, %v1063
        %v1124 = vpack.c.b16 %v1069, %v1064
        %v1125 = vpack.c.b16 %v1070, %v1065
        %v1126 = vpack.c.b16 %v1076, %v1071
        %v1127 = vpack.c.b16 %v1077, %v1072
        %v1128 = vpack.c.b16 %v1078, %v1073
        %v1129 = vpack.c.b16 %v1079, %v1074
        %v1130 = vpack.c.b16 %v1080, %v1075
        %v1131 = vpack.c.b16 %v1086, %v1081
        %v1132 = vpack.c.b16 %v1087, %v1082
        %v1133 = vpack.c.b16 %v1088, %v1083
        %v1134 = vpack.c.b16 %v1089, %v1084
        %v1135 = vpack.c.b16 %v1090, %v1085
        %v1136 = vpack.c.b16 %v1096, %v1091
        %v1137 = vpack.c.b16 %v1097, %v1092
        %v1138 = vpack.c.b16 %v1098, %v1093
        %v1139 = vpack.c.b16 %v1099, %v1094
        %v1140 = vpack.c.b16 %v1100, %v1095
        %1181 = vmatprep.subr.bf16.mxu0 %v1102
        %1182 = vmatpush1.bf16.msra.mxu0 %v1101
        %1183 = vmatprep.subr.bf16.mxu0 %v1107
        %1184 = vmatpush1.bf16.msra.mxu0 %v1106
        %1185 = vmatprep.subr.bf16.mxu0 %v1112
        %1186 = vmatpush1.bf16.msra.mxu0 %v1111
        %1187 = vmatprep.subr.bf16.mxu0 %v1117
        %1188 = vmatpush1.bf16.msra.mxu0 %v1116
        %1189 = vmatprep.subr.bf16.mxu0 %v1122
        %1190 = vmatpush1.bf16.msra.mxu0 %v1121
        %1191 = vmatprep.subr.bf16.mxu0 %v1127
        %1192 = vmatpush1.bf16.msra.mxu0 %v1126
        %1193 = vmatprep.subr.bf16.mxu0 %v1132
        %1194 = vmatpush1.bf16.msra.mxu0 %v1131
        %1195 = vmatprep.subr.bf16.mxu0 %v1137
        %1196 = vmatpush1.bf16.msra.mxu0 %v1136
        %1197 = vmatprep.subr.bf16.mxu0 0
        %1198 = vmatpush1.bf16.msra.mxu0 0
        %1199 = vmatprep.subr.bf16.mxu0 0
        %1200 = vmatpush1.bf16.msra.mxu0 0
        %1201 = vmatprep.subr.bf16.mxu0 0
        %1202 = vmatpush1.bf16.msra.mxu0 0
        %1203 = vmatprep.subr.bf16.mxu0 0
        %1204 = vmatpush1.bf16.msra.mxu0 0
        %1205 = vmatprep.subr.bf16.mxu0 0
        %1206 = vmatpush1.bf16.msra.mxu0 0
        %1207 = vmatprep.subr.bf16.mxu0 0
        %1208 = vmatpush1.bf16.msra.mxu0 0
        %1209 = vmatprep.subr.bf16.mxu0 0
        %1210 = vmatpush1.bf16.msra.mxu0 0
        %1211 = vmatprep.subr.bf16.mxu0 0
        %1212 = vmatpush1.bf16.msra.mxu0 0
        %1213 = vmatprep.mubr.bf16.mxu0 0
        %1214 = vmatmul.mubr.bf16.gmra.mrb[0].mxu0 %v538
        %v1215 = vpop.f32.mrb[0].mxu0
        %v1216 = vadd.f32 %v881, %v1215
        %v1217 = vpop.f32.mrb[0].mxu0
        %v1218 = vadd.f32 %v883, %v1217
        %v1219 = vpop.f32.mrb[0].mxu0
        %v1220 = vadd.f32 %v885, %v1219
        %v1221 = vpop.f32.mrb[0].mxu0
        %v1222 = vadd.f32 %v887, %v1221
        %1223 = vdwg.mxu0
        %1224 = vmatprep.subr.bf16.mxu0 %v1104
        %1225 = vmatpush1.bf16.msra.mxu0 %v1103
        %1226 = vmatprep.subr.bf16.mxu0 %v1109
        %1227 = vmatpush1.bf16.msra.mxu0 %v1108
        %1228 = vmatprep.subr.bf16.mxu0 %v1114
        %1229 = vmatpush1.bf16.msra.mxu0 %v1113
        %1230 = vmatprep.subr.bf16.mxu0 %v1119
        %1231 = vmatpush1.bf16.msra.mxu0 %v1118
        %1232 = vmatprep.subr.bf16.mxu0 %v1124
        %1233 = vmatpush1.bf16.msra.mxu0 %v1123
        %1234 = vmatprep.subr.bf16.mxu0 %v1129
        %1235 = vmatpush1.bf16.msra.mxu0 %v1128
        %1236 = vmatprep.subr.bf16.mxu0 %v1134
        %1237 = vmatpush1.bf16.msra.mxu0 %v1133
        %1238 = vmatprep.subr.bf16.mxu0 %v1139
        %1239 = vmatpush1.bf16.msra.mxu0 %v1138
        %1240 = vmatprep.subr.bf16.mxu0 0
        %1241 = vmatpush1.bf16.msra.mxu0 0
        %1242 = vmatprep.subr.bf16.mxu0 0
        %1243 = vmatpush1.bf16.msra.mxu0 0
        %1244 = vmatprep.subr.bf16.mxu0 0
        %1245 = vmatpush1.bf16.msra.mxu0 0
        %1246 = vmatprep.subr.bf16.mxu0 0
        %1247 = vmatpush1.bf16.msra.mxu0 0
        %1248 = vmatprep.subr.bf16.mxu0 0
        %1249 = vmatpush1.bf16.msra.mxu0 0
        %1250 = vmatprep.subr.bf16.mxu0 0
        %1251 = vmatpush1.bf16.msra.mxu0 0
        %1252 = vmatprep.subr.bf16.mxu0 0
        %1253 = vmatpush1.bf16.msra.mxu0 0
        %1254 = vmatprep.subr.bf16.mxu0 0
        %1255 = vmatpush1.bf16.msra.mxu0 0
        %1256 = vmatprep.mubr.bf16.mxu0 0
        %1257 = vmatmul.mubr.bf16.gmra.mrb[0].mxu0 %v538
        %v1258 = vpop.f32.mrb[0].mxu0
        %v1259 = vadd.f32 %v924, %v1258
        %v1260 = vpop.f32.mrb[0].mxu0
        %v1261 = vadd.f32 %v926, %v1260
        %v1262 = vpop.f32.mrb[0].mxu0
        %v1263 = vadd.f32 %v928, %v1262
        %v1264 = vpop.f32.mrb[0].mxu0
        %v1265 = vadd.f32 %v930, %v1264
        %1266 = vdwg.mxu0
        %1267 = vmatprep.subr.bf16.mxu0 0
        %1268 = vmatpush1.bf16.msra.mxu0 %v1105
        %1269 = vmatprep.subr.bf16.mxu0 0
        %1270 = vmatpush1.bf16.msra.mxu0 %v1110
        %1271 = vmatprep.subr.bf16.mxu0 0
        %1272 = vmatpush1.bf16.msra.mxu0 %v1115
        %1273 = vmatprep.subr.bf16.mxu0 0
        %1274 = vmatpush1.bf16.msra.mxu0 %v1120
        %1275 = vmatprep.subr.bf16.mxu0 0
        %1276 = vmatpush1.bf16.msra.mxu0 %v1125
        %1277 = vmatprep.subr.bf16.mxu0 0
        %1278 = vmatpush1.bf16.msra.mxu0 %v1130
        %1279 = vmatprep.subr.bf16.mxu0 0
        %1280 = vmatpush1.bf16.msra.mxu0 %v1135
        %1281 = vmatprep.subr.bf16.mxu0 0
        %1282 = vmatpush1.bf16.msra.mxu0 %v1140
        %1283 = vmatprep.subr.bf16.mxu0 0
        %1284 = vmatpush1.bf16.msra.mxu0 0
        %1285 = vmatprep.subr.bf16.mxu0 0
        %1286 = vmatpush1.bf16.msra.mxu0 0
        %1287 = vmatprep.subr.bf16.mxu0 0
        %1288 = vmatpush1.bf16.msra.mxu0 0
        %1289 = vmatprep.subr.bf16.mxu0 0
        %1290 = vmatpush1.bf16.msra.mxu0 0
        %1291 = vmatprep.subr.bf16.mxu0 0
        %1292 = vmatpush1.bf16.msra.mxu0 0
        %1293 = vmatprep.subr.bf16.mxu0 0
        %1294 = vmatpush1.bf16.msra.mxu0 0
        %1295 = vmatprep.subr.bf16.mxu0 0
        %1296 = vmatpush1.bf16.msra.mxu0 0
        %1297 = vmatprep.subr.bf16.mxu0 0
        %1298 = vmatpush1.bf16.msra.mxu0 0
        %1299 = vmatprep.mubr.bf16.mxu0 0
        %1300 = vmatmul.mubr.bf16.gmra.mrb[0].mxu0 %v538
        %v1301 = vpop.f32.mrb[0].mxu0
        %v1302 = vadd.f32 %v967, %v1301
        %v1303 = vpop.f32.mrb[0].mxu0
        %v1304 = vpop.f32.mrb[0].mxu0
        %v1305 = vadd.f32 %v970, %v1304
        %v1306 = vpop.f32.mrb[0].mxu0
        %1307 = vdwg.mxu0
        %v1308 = vld [vmem:[%s6] sm:$0x1f]
        %v1310 = vlaneseq
        %v1311 = vshrl.u32 %v1310, 7
        %v1312 = vsub.s32 0, %v1311
        %v1313 = vrot.slane %v1308, %v1312
        %v1314 = vlaneseq
        %v1315 = vshrl.u32 %v1314, 7
        %v1316 = vsub.s32 1, %v1315
        %v1317 = vrot.slane %v1308, %v1316
        %v1318 = vlaneseq
        %v1319 = vshrl.u32 %v1318, 7
        %v1320 = vsub.s32 2, %v1319
        %v1321 = vrot.slane %v1308, %v1320
        %v1322 = vlaneseq
        %v1323 = vshrl.u32 %v1322, 7
        %v1324 = vsub.s32 3, %v1323
        %v1325 = vrot.slane %v1308, %v1324
        %v1326 = vlaneseq
        %v1327 = vshrl.u32 %v1326, 7
        %v1328 = vsub.s32 4, %v1327
        %v1329 = vrot.slane %v1308, %v1328
        %v1335 = vadd.f32 %v1216, %v1313
        %v1336 = vadd.f32 %v1218, %v1317
        %v1337 = vadd.f32 %v1259, %v1321
        %v1338 = vadd.f32 %v1261, %v1325
        %v1339 = vadd.f32 %v1302, %v1329
        %v1340 = vadd.f32 %v1220, %v1313
        %v1341 = vadd.f32 %v1222, %v1317
        %v1342 = vadd.f32 %v1263, %v1321
        %v1343 = vadd.f32 %v1265, %v1325
        %v1344 = vadd.f32 %v1305, %v1329
        %v1345 = vtanh.pop %v1335
        %v1346 = vtanh.pop %v1340
        %v1347 = vxor.u32 %v1336, 2147483648
        %v1348 = vxor.u32 %v1337, 2147483648
        %v1349 = vxor.u32 %v1338, 2147483648
        %v1350 = vxor.u32 %v1339, 2147483648
        %v1351 = vxor.u32 %v1341, 2147483648
        %v1352 = vxor.u32 %v1342, 2147483648
        %v1353 = vxor.u32 %v1343, 2147483648
        %v1354 = vxor.u32 %v1344, 2147483648
        %v1355 = vmul.f32 %v1347, 1.442695
        %v1356 = vpow.pop %v1355
        %v1357 = vmul.f32 %v1348, 1.442695
        %v1358 = vpow.pop %v1357
        %v1359 = vmul.f32 %v1349, 1.442695
        %v1360 = vpow.pop %v1359
        %v1361 = vmul.f32 %v1350, 1.442695
        %v1362 = vpow.pop %v1361
        %v1363 = vmul.f32 %v1351, 1.442695
        %v1364 = vpow.pop %v1363
        %v1365 = vmul.f32 %v1352, 1.442695
        %v1366 = vpow.pop %v1365
        %v1367 = vmul.f32 %v1353, 1.442695
        %v1368 = vpow.pop %v1367
        %v1369 = vmul.f32 %v1354, 1.442695
        %v1370 = vpow.pop %v1369
        %v1371 = vadd.f32 %v1356, 1.0
        %v1372 = vadd.f32 %v1358, 1.0
        %v1373 = vadd.f32 %v1360, 1.0
        %v1374 = vadd.f32 %v1362, 1.0
        %v1375 = vadd.f32 %v1364, 1.0
        %v1376 = vadd.f32 %v1366, 1.0
        %v1377 = vadd.f32 %v1368, 1.0
        %v1378 = vadd.f32 %v1370, 1.0
        %v1379 = vrcp.pop %v1371
        %v1380 = vmul.f32 1.0, %v1379
        %v1381 = vrcp.pop %v1372
        %v1382 = vmul.f32 1.0, %v1381
        %v1383 = vrcp.pop %v1373
        %v1384 = vmul.f32 1.0, %v1383
        %v1385 = vrcp.pop %v1374
        %v1386 = vmul.f32 1.0, %v1385
        %v1387 = vrcp.pop %v1375
        %v1388 = vmul.f32 1.0, %v1387
        %v1389 = vrcp.pop %v1376
        %v1390 = vmul.f32 1.0, %v1389
        %v1391 = vrcp.pop %v1377
        %v1392 = vmul.f32 1.0, %v1391
        %v1393 = vrcp.pop %v1378
        %v1394 = vmul.f32 1.0, %v1393
        %v1395 = vmul.f32 %v1380, %v1345
        %v1396 = vmul.f32 %v1388, %v1346
        %v1397 = vld [vmem:[%s435] sm:$0xff]
        %v1398 = vld [vmem:[%s435 + $0x8] sm:$0xff]
        %v1399 = vmul.f32 %v1382, %v1397
        %v1400 = vmul.f32 %v1390, %v1398
        %v1401 = vadd.f32 %v1395, %v1399
        %v1402 = vadd.f32 %v1396, %v1400
        %v1403 = vld [vmem:[%s444] sm:$0xff]
        %v1404 = vld [vmem:[%s444 + $0x8] sm:$0xff]
        %v1405 = vmul.f32 %v1384, %v1403
        %v1406 = vmul.f32 %v1392, %v1404
        %v1407 = vadd.f32 %v1401, %v1405
        %v1408 = vadd.f32 %v1402, %v1406
        %v1409 = vtanh.pop %v1407
        %v1410 = vtanh.pop %v1408
        %v1411 = vmul.f32 %v1386, %v1409
        %v1412 = vmul.f32 %v1394, %v1410
        %1413 = vst [vmem:[%s497] sm:$0xff] %v1411
        %1414 = vst [vmem:[%s497 + $0x8] sm:$0xff] %v1412
        %1415 = vst [vmem:[%s504] sm:$0xff] %v1407
        %1416 = vst [vmem:[%s504 + $0x8] sm:$0xff] %v1408
        %s1417 = sand.u32 %s211, 1
        %s1418 = scalar_lea.sflag [#allocation4], %s1417
        %s1419 = sand.u32 %s211, 1
        %s1420 = smul.addr %s1419, 16
        %s1421 = scalar_lea.vmem [#allocation13], %s1420
        %s1422 = sand.u32 %s237, 1
        %s1423 = scalar_lea.sflag [#allocation15], %s1422
        %s1424 = sand.u32 %s237, 1
        %s1425 = smul.addr %s1424, 16
        %s1426 = scalar_lea.vmem [#allocation14], %s1425
        // Predicated region
        $region73: #{tpu_custom_call.1} parent=47 // pred_check
          %p1427 = pneg %p221
        $region74: #{tpu_custom_call.1} parent=47 // pred_check_branch
          %1429 = sbr.rel (%p1427) target = $region76
        $region75: #{tpu_custom_call.1} parent=47 // pred_region
          %s1430 = smul.u32 2, %s36
          %s1431 = ssub.s32 3, %s1430
          %p1432 = scmp.lt.s32.totalorder %s1431, 2
          %s1433 = scalar_select %p1432, %s1431, 2
          %s1434 = smul.u32 128, %s1433
          %s1436 = ssub.s32 256, %s1434
          %1437 = vsyncadd %s1418, %s1436
          %p1438 = scmp.ne.s32.totalorder 0, %s1434
          %s1439 = smul.addr %s1430, 128
          %s1440 = scalar_lea.hbm %s7, %s1439
          %s1441 = smul.u32 8, %s1433
          %s1442 = sshll.u32 %s1421, 4
          %s1443 = int_to_ptr.vmem [resolvable:$true] %s1442
          %s1444 = sshll.u32 %s1441, 4
          %1448 = dma.vmem_to_hbm [thread:$0]  (%p1438), %s1443, %s1444, %s1440, %s1418, 128, 128, 8
        $region76: #{tpu_custom_call.1} parent=47 // pred_fallthru
          _
        // Predicated region
        $region77: #{tpu_custom_call.1} parent=47 // pred_check
          %p1449 = pneg %p247
        $region78: #{tpu_custom_call.1} parent=47 // pred_check_branch
          %1451 = sbr.rel (%p1449) target = $region80
        $region79: #{tpu_custom_call.1} parent=47 // pred_region
          %s1452 = smul.u32 2, %s36
          %s1453 = ssub.s32 3, %s1452
          %p1454 = scmp.lt.s32.totalorder %s1453, 2
          %s1455 = scalar_select %p1454, %s1453, 2
          %s1456 = smul.u32 128, %s1455
          %s1458 = ssub.s32 256, %s1456
          %1459 = vsyncadd %s1423, %s1458
          %p1460 = scmp.ne.s32.totalorder 0, %s1456
          %s1461 = smul.addr %s1452, 128
          %s1462 = scalar_lea.hbm %s8, %s1461
          %s1463 = smul.u32 8, %s1455
          %s1464 = sshll.u32 %s1426, 4
          %s1465 = int_to_ptr.vmem [resolvable:$true] %s1464
          %s1466 = sshll.u32 %s1463, 4
          %1470 = dma.vmem_to_hbm [thread:$0]  (%p1460), %s1465, %s1466, %s1462, %s1423, 128, 128, 8
        $region80: #{tpu_custom_call.1} parent=47 // pred_fallthru
          _
      $region48: #{tpu_custom_call.1} parent=5 // pred_fallthru
        _
      %p1471 = scmp.le.s32.totalorder 2, %s31
      // Predicated region
      $region81: #{tpu_custom_call.1} parent=5 // pred_check
        %p1472 = pneg %p1471
      $region82: #{tpu_custom_call.1} parent=5 // pred_check_branch
        %1474 = sbr.rel (%p1472) target = $region84
      $region83: #{tpu_custom_call.1} parent=5 // pred_region
        %s1475 = ssub.s32 %s31, 2
        // Predicated region
        $region85: #{tpu_custom_call.1} parent=83 // pred_check
          %p1476 = pneg %p227
        $region86: #{tpu_custom_call.1} parent=83 // pred_check_branch
          %1478 = sbr.rel (%p1476) target = $region88
        $region87: #{tpu_custom_call.1} parent=83 // pred_region
          %s1479 = sand.u32 %s212, 1
          %s1480 = scalar_lea.sflag [#allocation4], %s1479
          %s1481 = sand.u32 %s212, 1
          %s1482 = smul.addr %s1481, 16
          %s1483 = scalar_lea.vmem [#allocation13], %s1482
          %1484 = dma.done %s1480, 256
        $region88: #{tpu_custom_call.1} parent=83 // pred_fallthru
          _
        // Predicated region
        $region89: #{tpu_custom_call.1} parent=83 // pred_check
          %p1485 = pneg %p253
        $region90: #{tpu_custom_call.1} parent=83 // pred_check_branch
          %1487 = sbr.rel (%p1485) target = $region92
        $region91: #{tpu_custom_call.1} parent=83 // pred_region
          %s1488 = sand.u32 %s238, 1
          %s1489 = scalar_lea.sflag [#allocation15], %s1488
          %s1490 = sand.u32 %s238, 1
          %s1491 = smul.addr %s1490, 16
          %s1492 = scalar_lea.vmem [#allocation14], %s1491
          %1493 = dma.done %s1489, 256
        $region92: #{tpu_custom_call.1} parent=83 // pred_fallthru
          _
      $region84: #{tpu_custom_call.1} parent=5 // pred_fallthru
        _
    $region6: #{tpu_custom_call.1} parent=1 // loop_footer
      %s35 = sadd.s32 1, %s31
    $region7: #{tpu_custom_call.1} parent=1 // loop_footer_branch
      %30 = sbr.rel target = $region3
    $region8: #{tpu_custom_call.1} parent=1 // loop_exit
      _
    %1494 = vsyncpa [#allocation3], 1
    %s1495 = scalar_lea.sflag [#allocation3], 1
    %1496 = vsyncpa %s1495, 1
    %1497 = vsyncpa [#allocation6], 1
    %s1498 = scalar_lea.sflag [#allocation6], 1
    %1499 = vsyncpa %s1498, 1
    %1500 = vsyncpa [#allocation9], 1
    %s1501 = scalar_lea.sflag [#allocation9], 1
    %1502 = vsyncpa %s1501, 1
    %1503 = vsyncpa [#allocation12], 1
    %1504 = vsyncpa [#allocation4], 1
    %s1505 = scalar_lea.sflag [#allocation4], 1
    %1506 = vsyncpa %s1505, 1
    %1507 = vsyncpa [#allocation15], 1
    %s1508 = scalar_lea.sflag [#allocation15], 1
    %1509 = vsyncpa %s1508, 1

</llo_original>
